<compile_context>
chip_gen: v5e
topology: v5e:2x2
jax: 0.10.0
libtpu: 0.0.40
codegen_flags: <defaults>
</compile_context>

<pallas_src>
import functools

import numpy as np

import jax
import jax.numpy as jnp
from jax import lax
from jax.experimental import pallas as pl
from jax.experimental.pallas import tpu as pltpu


# ----------------------------------------------------------------------------
# Host-side (trace-time) constant builders
# ----------------------------------------------------------------------------
def _bilinear_axis_matrix(n_in, n_out):
    """(n_out, n_in) align_corners=True 1-D linear interpolation matrix."""
    m = np.zeros((n_out, n_in), np.float32)
    if n_in == 1 or n_out == 1:
        m[:, 0] = 1.0
        return m
    src = np.arange(n_out, dtype=np.float64) * (n_in - 1) / (n_out - 1)
    i0 = np.clip(np.floor(src).astype(np.int64), 0, n_in - 1)
    i1 = np.minimum(i0 + 1, n_in - 1)
    w = (src - i0).astype(np.float32)
    m[np.arange(n_out), i0] += 1.0 - w
    m[np.arange(n_out), i1] += w
    return m


def _bilinear_upsample_matrix(h_in, w_in, h_out, w_out):
    """(h_in*w_in, h_out*w_out): flat_out = flat_in @ M  (separable bilinear)."""
    uy = _bilinear_axis_matrix(h_in, h_out)          # (h_out, h_in)
    ux = _bilinear_axis_matrix(w_in, w_out)          # (w_out, w_in)
    return np.ascontiguousarray(np.kron(uy, ux).T.astype(np.float32))


def _conv3x3_tap_masks(n, h, w):
    """(9, n*h*w) 0/1 masks: tap (dy,dx) is valid (in-image) at each pixel."""
    r = np.tile(np.repeat(np.arange(h), w), n)       # row index of flattened pixel
    c = np.tile(np.arange(w), n * h)                 # col index of flattened pixel
    masks = np.zeros((9, n * h * w), np.float32)
    for dy in range(3):
        for dx in range(3):
            rr = r + dy - 1
            cc = c + dx - 1
            masks[dy * 3 + dx] = (
                (rr >= 0) & (rr < h) & (cc >= 0) & (cc < w)).astype(np.float32)
    return masks


# ----------------------------------------------------------------------------
# The single fused kernel: upsample + concat + (conv3x3 -> BN -> ReLU) x 2
# ----------------------------------------------------------------------------
def _up_double_conv_kernel(
    x1_ref, x2_ref, uk_ref, mask_ref,
    w1_ref, b1_ref, g1_ref, be1_ref,
    w2_ref, b2_ref, g2_ref, be2_ref,
    out_ref,
    xcat_s, patch_s,
    *, N, C1, C2, Cout, HW, W, eps,
):
    Cin = C1 + C2
    P = N * HW

    # ---- bilinear x2 upsample of x1: ONE batched MXU matmul ----
    up_all = jnp.dot(x1_ref[...], uk_ref[...],
                     preferred_element_type=jnp.float32)          # (N*C1, HW)

    # ---- channel concat [x2, up(x1)] packed lane-dense as (Cin, N*H*W) ----
    for n in range(N):
        lo, hi = n * HW, (n + 1) * HW
        xcat_s[0:C2, lo:hi] = x2_ref[n]                           # skip channels
        xcat_s[C2:Cin, lo:hi] = up_all[n * C1:(n + 1) * C1, :]    # upsampled x1

    def conv3x3(src, w_ref, b_ref, cin):
        # im2col: 9 rolled + masked copies of `src` stacked along sublanes,
        # then ONE lane-dense MXU matmul (Cout, 9*cin) @ (9*cin, P).
        # Roll offsets never leak across image/row boundaries because every
        # out-of-image tap is a zero-padding tap -> masked to 0.
        for dy in range(3):
            for dx in range(3):
                t = dy * 3 + dx
                d = (dy - 1) * W + (dx - 1)                       # flat tap offset
                tap = src if d == 0 else pltpu.roll(src, (-d) % P, axis=1)
                patch_s[t * cin:(t + 1) * cin, :] = tap * mask_ref[t:t + 1, :]
        return jnp.dot(w_ref[...], patch_s[0:9 * cin, :],
                       preferred_element_type=jnp.float32) + b_ref[...]

    def bn_relu(y, g_ref, be_ref):
        # Training-mode BatchNorm2d: biased batch stats over N*H*W, centered
        # two-pass variance; cross-lane reductions on the (Cout, P) layout.
        inv_p = 1.0 / P
        mean = jnp.sum(y, axis=1, keepdims=True) * inv_p          # (Cout, 1)
        yc = y - mean
        var = jnp.sum(yc * yc, axis=1, keepdims=True) * inv_p
        scale = g_ref[...] * lax.rsqrt(var + eps)
        return jnp.maximum(yc * scale + be_ref[...], 0.0)

    h1 = bn_relu(conv3x3(xcat_s[...], w1_ref, b1_ref, Cin), g1_ref, be1_ref)
    h2 = bn_relu(conv3x3(h1, w2_ref, b2_ref, Cout), g2_ref, be2_ref)

    # Lane-dense output: (N, Cout, H*W) -> 256-lane rows (unmasked stores).
    for n in range(N):
        out_ref[n] = h2[:, n * HW:(n + 1) * HW]


def _pallas_up_double_conv(x1f, x2f, ukron, masks,
                           w1m, b1, g1, be1, w2m, b2, g2, be2, *, N, C1, W):
    NC1, HW_in = x1f.shape
    _, C2, HW = x2f.shape
    Cin = C1 + C2
    Cout = w1m.shape[0]
    P = N * HW

    kernel = functools.partial(
        _up_double_conv_kernel,
        N=N, C1=C1, C2=C2, Cout=Cout, HW=HW, W=W, eps=1e-5)

    def full(shape):
        return pl.BlockSpec(shape, lambda *_: (0,) * len(shape))

    return pl.pallas_call(
        kernel,
        out_shape=jax.ShapeDtypeStruct((N, Cout, HW), jnp.float32),
        grid_spec=pltpu.PrefetchScalarGridSpec(
            num_scalar_prefetch=0,
            grid=(1,),
            in_specs=[
                full((NC1, HW_in)),         # x1, (N*C1, H1*W1) flattened
                full((N, C2, HW)),          # x2 (padded skip), flattened pixels
                full((HW_in, HW)),          # bilinear upsample matrix
                full((9, P)),               # conv zero-padding tap masks
                full((Cout, 9 * Cin)),      # conv1 weight, im2col layout
                full((Cout, 1)),            # conv1 bias
                full((Cout, 1)),            # bn1 gamma
                full((Cout, 1)),            # bn1 beta
                full((Cout, 9 * Cout)),     # conv2 weight, im2col layout
                full((Cout, 1)),            # conv2 bias
                full((Cout, 1)),            # bn2 gamma
                full((Cout, 1)),            # bn2 beta
            ],
            out_specs=full((N, Cout, HW)),
            scratch_shapes=[
                pltpu.VMEM((Cin, P), jnp.float32),        # concat [x2, up(x1)]
                pltpu.VMEM((9 * Cin, P), jnp.float32),    # im2col patches (reused)
            ],
        ),
        compiler_params=pltpu.CompilerParams(
            dimension_semantics=("arbitrary",),
        ),
    )(x1f, x2f, ukron, masks, w1m, b1, g1, be1, w2m, b2, g2, be2)


# ----------------------------------------------------------------------------
# The `up` module forward (NCHW in / NCHW out, like PyTorch)
# ----------------------------------------------------------------------------
def up_forward(x1_nchw, x2_nchw, params):
    N, C1, H1, W1 = x1_nchw.shape
    _, C2, H2, W2 = x2_nchw.shape
    Ho, Wo = 2 * H1, 2 * W1

    # Reproduce the original module's (X/Y-swapped) F.pad on the skip exactly:
    #   diffX = x1.size(2) - x2.size(2); diffY = x1.size(3) - x2.size(3)
    #   F.pad(x2, (diffX//2, diffX//2, diffY//2, diffY//2))  # pads W then H
    diffX = Ho - H2
    diffY = Wo - W2
    x2p = jnp.pad(x2_nchw.astype(jnp.float32),
                  ((0, 0), (0, 0),
                   (diffY // 2, diffY // 2),     # H receives the "Y" amounts
                   (diffX // 2, diffX // 2)))    # W receives the "X" amounts
    assert x2p.shape[2] == Ho and x2p.shape[3] == Wo, "skip/decoder size mismatch"

    # Contiguous reshapes only; no transposes, no host-side halo padding.
    x1f = x1_nchw.astype(jnp.float32).reshape(N * C1, H1 * W1)
    x2f = x2p.reshape(N, C2, Ho * Wo)

    ukron = jnp.asarray(_bilinear_upsample_matrix(H1, W1, Ho, Wo))
    masks = jnp.asarray(_conv3x3_tap_masks(N, Ho, Wo))

    Cin = C1 + C2
    Cout = params["w1"].shape[-1]
    # HWIO (3,3,Cin,Cout) -> (Cout, 9*Cin), K ordered (ky, kx, cin); the cin
    # axis is ordered like the channel concat ([x2 channels, x1 channels]).
    w1m = params["w1"].reshape(9 * Cin, Cout).T
    w2m = params["w2"].reshape(9 * Cout, Cout).T
    col = lambda v: v.reshape(-1, 1)

    out = _pallas_up_double_conv(
        x1f, x2f, ukron, masks,
        w1m, col(params["b1"]), col(params["g1"]), col(params["be1"]),
        w2m, col(params["b2"]), col(params["g2"]), col(params["be2"]),
        N=N, C1=C1, W=Wo)
    return out.reshape(N, Cout, Ho, Wo)


# ----------------------------------------------------------------------------
# Pure-JAX reference (independent of the kernel's im2col/roll machinery)
# ----------------------------------------------------------------------------
def up_forward_ref(x1, x2, params, eps=1e-5):
    N, C1, H1, W1 = x1.shape
    Ho, Wo = 2 * H1, 2 * W1
    uy = jnp.asarray(_bilinear_axis_matrix(H1, Ho))   # (Ho, H1)
    ux = jnp.asarray(_bilinear_axis_matrix(W1, Wo))   # (Wo, W1)
    x1u = jnp.einsum("oh,pw,nchw->ncop", uy, ux, x1.astype(jnp.float32),
                     precision=lax.Precision.HIGHEST)
    diffX = Ho - x2.shape[2]
    diffY = Wo - x2.shape[3]
    x2p = jnp.pad(x2.astype(jnp.float32),
                  ((0, 0), (0, 0),
                   (diffY // 2, diffY // 2), (diffX // 2, diffX // 2)))
    x = jnp.concatenate([x2p, x1u], axis=1)

    def conv_bn_relu(x, w_hwio, b, g, be):
        w = jnp.transpose(w_hwio, (3, 2, 0, 1))       # OIHW
        y = lax.conv_general_dilated(
            x, w, (1, 1), ((1, 1), (1, 1)),
            dimension_numbers=("NCHW", "OIHW", "NCHW"),
            precision=lax.Precision.HIGHEST)
        y = y + b[None, :, None, None]
        mean = jnp.mean(y, axis=(0, 2, 3), keepdims=True)
        var = jnp.mean((y - mean) ** 2, axis=(0, 2, 3), keepdims=True)
        y = (y - mean) * lax.rsqrt(var + eps)
        y = y * g[None, :, None, None] + be[None, :, None, None]
        return jnp.maximum(y, 0.0)

    x = conv_bn_relu(x, params["w1"], params["b1"], params["g1"], params["be1"])
    x = conv_bn_relu(x, params["w2"], params["b2"], params["g2"], params["be2"])
    return x


def init_params(key, in_ch, out_ch):
    k = jax.random.split(key, 4)
    fan1 = in_ch * 9
    fan2 = out_ch * 9
    b1 = 1.0 / jnp.sqrt(fan1)
    b2 = 1.0 / jnp.sqrt(fan2)
    return {
        # conv weights in HWIO layout (3, 3, Cin, Cout)
        "w1": jax.random.uniform(k[0], (3, 3, in_ch, out_ch), jnp.float32, -b1, b1),
        "b1": jax.random.uniform(k[1], (out_ch,), jnp.float32, -b1, b1),
        "g1": jnp.ones((out_ch,), jnp.float32),    # BN gamma (PyTorch default)
        "be1": jnp.zeros((out_ch,), jnp.float32),  # BN beta
        "w2": jax.random.uniform(k[2], (3, 3, out_ch, out_ch), jnp.float32, -b2, b2),
        "b2": jax.random.uniform(k[3], (out_ch,), jnp.float32, -b2, b2),
        "g2": jnp.ones((out_ch,), jnp.float32),
        "be2": jnp.zeros((out_ch,), jnp.float32),
    }


if __name__ == "__main__":
    key = jax.random.PRNGKey(0)
    k1, k2, kp = jax.random.split(key, 3)

    # U-Net style: x1 is the low-res decoder feature, x2 the skip connection.
    # in_ch = C(x1) + C(x2) = 8, out_ch = 4.
    N, C1, H1, W1 = 2, 4, 8, 8
    C2, H2, W2 = 4, 16, 16
    in_ch, out_ch = C1 + C2, 4

    x1 = jax.random.normal(k1, (N, C1, H1, W1), jnp.float32)   # NCHW
    x2 = jax.random.normal(k2, (N, C2, H2, W2), jnp.float32)   # NCHW
    params = init_params(kp, in_ch, out_ch)

    out = jax.jit(up_forward)(x1, x2, params)
    out = jax.block_until_ready(out)

    assert out.shape == (N, out_ch, H2, W2), out.shape
    assert out.dtype == jnp.float32
    assert bool(jnp.all(jnp.isfinite(out)))

    # Correctness check against an independent pure-JAX reference.
    ref = jax.block_until_ready(jax.jit(up_forward_ref)(x1, x2, params))
    err = float(jnp.max(jnp.abs(out - ref)))
    assert np.isfinite(err) and err < 5e-3, f"max abs error vs reference: {err}"

    print("KERNEL_OK")
</pallas_src>

<mosaic_0001>
module attributes {stable_mosaic.version = 11 : i64} {
  func.func @_up_double_conv_kernel(%arg0: i32, %arg1: memref<8x64xf32, #tpu.memory_space<vmem>>, %arg2: memref<2x4x256xf32, #tpu.memory_space<vmem>>, %arg3: memref<64x256xf32, #tpu.memory_space<vmem>>, %arg4: memref<9x512xf32, #tpu.memory_space<vmem>>, %arg5: memref<4x72xf32, #tpu.memory_space<vmem>>, %arg6: memref<4x1xf32, #tpu.memory_space<vmem>>, %arg7: memref<4x1xf32, #tpu.memory_space<vmem>>, %arg8: memref<4x1xf32, #tpu.memory_space<vmem>>, %arg9: memref<4x36xf32, #tpu.memory_space<vmem>>, %arg10: memref<4x1xf32, #tpu.memory_space<vmem>>, %arg11: memref<4x1xf32, #tpu.memory_space<vmem>>, %arg12: memref<4x1xf32, #tpu.memory_space<vmem>>, %arg13: memref<2x4x256xf32, #tpu.memory_space<vmem>>, %arg14: memref<8x512xf32, #tpu.memory_space<vmem>>, %arg15: memref<72x512xf32, #tpu.memory_space<vmem>>) attributes {dimension_semantics = [#tpu.dimension_semantics<arbitrary>], iteration_bounds = array<i64: 1>, scalar_prefetch = 0 : i64, scratch_operands = 2 : i64, tpu.core_type = #tpu.core_type<tc>, window_params = [{pipeline_mode = #tpu.pipeline_mode<synchronous>, transform_indices = @transform_0, window_bounds = array<i64: 8, 64>}, {pipeline_mode = #tpu.pipeline_mode<synchronous>, transform_indices = @transform_1, window_bounds = array<i64: 2, 4, 256>}, {pipeline_mode = #tpu.pipeline_mode<synchronous>, transform_indices = @transform_2, window_bounds = array<i64: 64, 256>}, {pipeline_mode = #tpu.pipeline_mode<synchronous>, transform_indices = @transform_3, window_bounds = array<i64: 9, 512>}, {pipeline_mode = #tpu.pipeline_mode<synchronous>, transform_indices = @transform_4, window_bounds = array<i64: 4, 72>}, {pipeline_mode = #tpu.pipeline_mode<synchronous>, transform_indices = @transform_5, window_bounds = array<i64: 4, 1>}, {pipeline_mode = #tpu.pipeline_mode<synchronous>, transform_indices = @transform_6, window_bounds = array<i64: 4, 1>}, {pipeline_mode = #tpu.pipeline_mode<synchronous>, transform_indices = @transform_7, window_bounds = array<i64: 4, 1>}, {pipeline_mode = #tpu.pipeline_mode<synchronous>, transform_indices = @transform_8, window_bounds = array<i64: 4, 36>}, {pipeline_mode = #tpu.pipeline_mode<synchronous>, transform_indices = @transform_9, window_bounds = array<i64: 4, 1>}, {pipeline_mode = #tpu.pipeline_mode<synchronous>, transform_indices = @transform_10, window_bounds = array<i64: 4, 1>}, {pipeline_mode = #tpu.pipeline_mode<synchronous>, transform_indices = @transform_11, window_bounds = array<i64: 4, 1>}, {pipeline_mode = #tpu.pipeline_mode<synchronous>, transform_indices = @transform_12, window_bounds = array<i64: 2, 4, 256>}]} {
    %c0 = arith.constant 0 : index
    %c0_0 = arith.constant 0 : index
    %0 = vector.load %arg1[%c0, %c0_0] : memref<8x64xf32, #tpu.memory_space<vmem>>, vector<8x64xf32>
    %c0_1 = arith.constant 0 : index
    %c0_2 = arith.constant 0 : index
    %1 = vector.load %arg3[%c0_1, %c0_2] : memref<64x256xf32, #tpu.memory_space<vmem>>, vector<64x256xf32>
    %cst = arith.constant dense<0.000000e+00> : vector<8x256xf32>
    %2 = tpu.matmul %0, %1, %cst {dimension_numbers = #tpu.dot_dimension_numbers<[1], [0], [0], [1], [0, 0, 1, 1], [], []>} : vector<8x64xf32>, vector<64x256xf32>, vector<8x256xf32> -> vector<8x256xf32>
    %c0_3 = arith.constant 0 : index
    %c0_4 = arith.constant 0 : index
    %c0_5 = arith.constant 0 : index
    %3 = vector.load %arg2[%c0_3, %c0_4, %c0_5] : memref<2x4x256xf32, #tpu.memory_space<vmem>>, vector<1x4x256xf32>
    %4 = vector.shape_cast %3 : vector<1x4x256xf32> to vector<4x256xf32>
    %c0_6 = arith.constant 0 : index
    %c0_7 = arith.constant 0 : index
    %5 = vector.load %arg14[%c0_6, %c0_7] : memref<8x512xf32, #tpu.memory_space<vmem>>, vector<4x256xf32>
    tpu.vector_store %arg14[%c0_6, %c0_7], %4 {strides = array<i32>} : memref<8x512xf32, #tpu.memory_space<vmem>>, vector<4x256xf32>,
    %6 = vector.extract_strided_slice %2 {offsets = [0, 0], sizes = [4, 256], strides = [1, 1]} : vector<8x256xf32> to vector<4x256xf32>
    %c4 = arith.constant 4 : index
    %c0_8 = arith.constant 0 : index
    %7 = vector.load %arg14[%c4, %c0_8] : memref<8x512xf32, #tpu.memory_space<vmem>>, vector<4x256xf32>
    tpu.vector_store %arg14[%c4, %c0_8], %6 {strides = array<i32>} : memref<8x512xf32, #tpu.memory_space<vmem>>, vector<4x256xf32>,
    %c1 = arith.constant 1 : index
    %c0_9 = arith.constant 0 : index
    %c0_10 = arith.constant 0 : index
    %8 = vector.load %arg2[%c1, %c0_9, %c0_10] : memref<2x4x256xf32, #tpu.memory_space<vmem>>, vector<1x4x256xf32>
    %9 = vector.shape_cast %8 : vector<1x4x256xf32> to vector<4x256xf32>
    %c0_11 = arith.constant 0 : index
    %c256 = arith.constant 256 : index
    %10 = vector.load %arg14[%c0_11, %c256] : memref<8x512xf32, #tpu.memory_space<vmem>>, vector<4x256xf32>
    tpu.vector_store %arg14[%c0_11, %c256], %9 {strides = array<i32>} : memref<8x512xf32, #tpu.memory_space<vmem>>, vector<4x256xf32>,
    %11 = vector.extract_strided_slice %2 {offsets = [4, 0], sizes = [4, 256], strides = [1, 1]} : vector<8x256xf32> to vector<4x256xf32>
    %c4_12 = arith.constant 4 : index
    %c256_13 = arith.constant 256 : index
    %12 = vector.load %arg14[%c4_12, %c256_13] : memref<8x512xf32, #tpu.memory_space<vmem>>, vector<4x256xf32>
    tpu.vector_store %arg14[%c4_12, %c256_13], %11 {strides = array<i32>} : memref<8x512xf32, #tpu.memory_space<vmem>>, vector<4x256xf32>,
    %c0_14 = arith.constant 0 : index
    %c0_15 = arith.constant 0 : index
    %13 = vector.load %arg14[%c0_14, %c0_15] : memref<8x512xf32, #tpu.memory_space<vmem>>, vector<8x512xf32>
    %c17_i32 = arith.constant 17 : i32
    %14 = tpu.dynamic_rotate %13 by %c17_i32 dim 1 : vector<8x512xf32>, i32 -> vector<8x512xf32>
    %c0_16 = arith.constant 0 : index
    %c0_17 = arith.constant 0 : index
    %15 = vector.load %arg4[%c0_16, %c0_17] : memref<9x512xf32, #tpu.memory_space<vmem>>, vector<1x512xf32>
    %16 = vector.broadcast %15 : vector<1x512xf32> to vector<8x512xf32>
    %17 = arith.mulf %14, %16 : vector<8x512xf32>
    %c0_18 = arith.constant 0 : index
    %c0_19 = arith.constant 0 : index
    %18 = vector.load %arg15[%c0_18, %c0_19] : memref<72x512xf32, #tpu.memory_space<vmem>>, vector<8x512xf32>
    tpu.vector_store %arg15[%c0_18, %c0_19], %17 {strides = array<i32>} : memref<72x512xf32, #tpu.memory_space<vmem>>, vector<8x512xf32>,
    %c16_i32 = arith.constant 16 : i32
    %19 = tpu.dynamic_rotate %13 by %c16_i32 dim 1 : vector<8x512xf32>, i32 -> vector<8x512xf32>
    %c1_20 = arith.constant 1 : index
    %c0_21 = arith.constant 0 : index
    %20 = vector.load %arg4[%c1_20, %c0_21] : memref<9x512xf32, #tpu.memory_space<vmem>>, vector<1x512xf32>
    %21 = vector.broadcast %20 : vector<1x512xf32> to vector<8x512xf32>
    %22 = arith.mulf %19, %21 : vector<8x512xf32>
    %c8 = arith.constant 8 : index
    %c0_22 = arith.constant 0 : index
    %23 = vector.load %arg15[%c8, %c0_22] : memref<72x512xf32, #tpu.memory_space<vmem>>, vector<8x512xf32>
    tpu.vector_store %arg15[%c8, %c0_22], %22 {strides = array<i32>} : memref<72x512xf32, #tpu.memory_space<vmem>>, vector<8x512xf32>,
    %c15_i32 = arith.constant 15 : i32
    %24 = tpu.dynamic_rotate %13 by %c15_i32 dim 1 : vector<8x512xf32>, i32 -> vector<8x512xf32>
    %c2 = arith.constant 2 : index
    %c0_23 = arith.constant 0 : index
    %25 = vector.load %arg4[%c2, %c0_23] : memref<9x512xf32, #tpu.memory_space<vmem>>, vector<1x512xf32>
    %26 = vector.broadcast %25 : vector<1x512xf32> to vector<8x512xf32>
    %27 = arith.mulf %24, %26 : vector<8x512xf32>
    %c16 = arith.constant 16 : index
    %c0_24 = arith.constant 0 : index
    %28 = vector.load %arg15[%c16, %c0_24] : memref<72x512xf32, #tpu.memory_space<vmem>>, vector<8x512xf32>
    tpu.vector_store %arg15[%c16, %c0_24], %27 {strides = array<i32>} : memref<72x512xf32, #tpu.memory_space<vmem>>, vector<8x512xf32>,
    %c1_i32 = arith.constant 1 : i32
    %29 = tpu.dynamic_rotate %13 by %c1_i32 dim 1 : vector<8x512xf32>, i32 -> vector<8x512xf32>
    %c3 = arith.constant 3 : index
    %c0_25 = arith.constant 0 : index
    %30 = vector.load %arg4[%c3, %c0_25] : memref<9x512xf32, #tpu.memory_space<vmem>>, vector<1x512xf32>
    %31 = vector.broadcast %30 : vector<1x512xf32> to vector<8x512xf32>
    %32 = arith.mulf %29, %31 : vector<8x512xf32>
    %c24 = arith.constant 24 : index
    %c0_26 = arith.constant 0 : index
    %33 = vector.load %arg15[%c24, %c0_26] : memref<72x512xf32, #tpu.memory_space<vmem>>, vector<8x512xf32>
    tpu.vector_store %arg15[%c24, %c0_26], %32 {strides = array<i32>} : memref<72x512xf32, #tpu.memory_space<vmem>>, vector<8x512xf32>,
    %c4_27 = arith.constant 4 : index
    %c0_28 = arith.constant 0 : index
    %34 = vector.load %arg4[%c4_27, %c0_28] : memref<9x512xf32, #tpu.memory_space<vmem>>, vector<1x512xf32>
    %35 = vector.broadcast %34 : vector<1x512xf32> to vector<8x512xf32>
    %36 = arith.mulf %13, %35 : vector<8x512xf32>
    %c32 = arith.constant 32 : index
    %c0_29 = arith.constant 0 : index
    %37 = vector.load %arg15[%c32, %c0_29] : memref<72x512xf32, #tpu.memory_space<vmem>>, vector<8x512xf32>
    tpu.vector_store %arg15[%c32, %c0_29], %36 {strides = array<i32>} : memref<72x512xf32, #tpu.memory_space<vmem>>, vector<8x512xf32>,
    %c511_i32 = arith.constant 511 : i32
    %38 = tpu.dynamic_rotate %13 by %c511_i32 dim 1 : vector<8x512xf32>, i32 -> vector<8x512xf32>
    %c5 = arith.constant 5 : index
    %c0_30 = arith.constant 0 : index
    %39 = vector.load %arg4[%c5, %c0_30] : memref<9x512xf32, #tpu.memory_space<vmem>>, vector<1x512xf32>
    %40 = vector.broadcast %39 : vector<1x512xf32> to vector<8x512xf32>
    %41 = arith.mulf %38, %40 : vector<8x512xf32>
    %c40 = arith.constant 40 : index
    %c0_31 = arith.constant 0 : index
    %42 = vector.load %arg15[%c40, %c0_31] : memref<72x512xf32, #tpu.memory_space<vmem>>, vector<8x512xf32>
    tpu.vector_store %arg15[%c40, %c0_31], %41 {strides = array<i32>} : memref<72x512xf32, #tpu.memory_space<vmem>>, vector<8x512xf32>,
    %c497_i32 = arith.constant 497 : i32
    %43 = tpu.dynamic_rotate %13 by %c497_i32 dim 1 : vector<8x512xf32>, i32 -> vector<8x512xf32>
    %c6 = arith.constant 6 : index
    %c0_32 = arith.constant 0 : index
    %44 = vector.load %arg4[%c6, %c0_32] : memref<9x512xf32, #tpu.memory_space<vmem>>, vector<1x512xf32>
    %45 = vector.broadcast %44 : vector<1x512xf32> to vector<8x512xf32>
    %46 = arith.mulf %43, %45 : vector<8x512xf32>
    %c48 = arith.constant 48 : index
    %c0_33 = arith.constant 0 : index
    %47 = vector.load %arg15[%c48, %c0_33] : memref<72x512xf32, #tpu.memory_space<vmem>>, vector<8x512xf32>
    tpu.vector_store %arg15[%c48, %c0_33], %46 {strides = array<i32>} : memref<72x512xf32, #tpu.memory_space<vmem>>, vector<8x512xf32>,
    %c496_i32 = arith.constant 496 : i32
    %48 = tpu.dynamic_rotate %13 by %c496_i32 dim 1 : vector<8x512xf32>, i32 -> vector<8x512xf32>
    %c7 = arith.constant 7 : index
    %c0_34 = arith.constant 0 : index
    %49 = vector.load %arg4[%c7, %c0_34] : memref<9x512xf32, #tpu.memory_space<vmem>>, vector<1x512xf32>
    %50 = vector.broadcast %49 : vector<1x512xf32> to vector<8x512xf32>
    %51 = arith.mulf %48, %50 : vector<8x512xf32>
    %c56 = arith.constant 56 : index
    %c0_35 = arith.constant 0 : index
    %52 = vector.load %arg15[%c56, %c0_35] : memref<72x512xf32, #tpu.memory_space<vmem>>, vector<8x512xf32>
    tpu.vector_store %arg15[%c56, %c0_35], %51 {strides = array<i32>} : memref<72x512xf32, #tpu.memory_space<vmem>>, vector<8x512xf32>,
    %c495_i32 = arith.constant 495 : i32
    %53 = tpu.dynamic_rotate %13 by %c495_i32 dim 1 : vector<8x512xf32>, i32 -> vector<8x512xf32>
    %c8_36 = arith.constant 8 : index
    %c0_37 = arith.constant 0 : index
    %54 = vector.load %arg4[%c8_36, %c0_37] : memref<9x512xf32, #tpu.memory_space<vmem>>, vector<1x512xf32>
    %55 = vector.broadcast %54 : vector<1x512xf32> to vector<8x512xf32>
    %56 = arith.mulf %53, %55 : vector<8x512xf32>
    %c64 = arith.constant 64 : index
    %c0_38 = arith.constant 0 : index
    %57 = vector.load %arg15[%c64, %c0_38] : memref<72x512xf32, #tpu.memory_space<vmem>>, vector<8x512xf32>
    tpu.vector_store %arg15[%c64, %c0_38], %56 {strides = array<i32>} : memref<72x512xf32, #tpu.memory_space<vmem>>, vector<8x512xf32>,
    %c0_39 = arith.constant 0 : index
    %c0_40 = arith.constant 0 : index
    %58 = vector.load %arg5[%c0_39, %c0_40] : memref<4x72xf32, #tpu.memory_space<vmem>>, vector<4x72xf32>
    %c0_41 = arith.constant 0 : index
    %c0_42 = arith.constant 0 : index
    %59 = vector.load %arg15[%c0_41, %c0_42] : memref<72x512xf32, #tpu.memory_space<vmem>>, vector<72x512xf32>
    %cst_43 = arith.constant dense<0.000000e+00> : vector<4x512xf32>
    %60 = tpu.matmul %58, %59, %cst_43 {dimension_numbers = #tpu.dot_dimension_numbers<[1], [0], [0], [1], [0, 0, 1, 1], [], []>} : vector<4x72xf32>, vector<72x512xf32>, vector<4x512xf32> -> vector<4x512xf32>
    %c0_44 = arith.constant 0 : index
    %c0_45 = arith.constant 0 : index
    %61 = vector.load %arg6[%c0_44, %c0_45] : memref<4x1xf32, #tpu.memory_space<vmem>>, vector<4x1xf32>
    %62 = vector.broadcast %61 : vector<4x1xf32> to vector<4x512xf32>
    %63 = arith.addf %60, %62 : vector<4x512xf32>
    %cst_46 = arith.constant dense<0.000000e+00> : vector<4xf32>
    %64 = vector.multi_reduction <add>, %63, %cst_46 [1] : vector<4x512xf32> to vector<4xf32>
    %65 = vector.shape_cast %64 : vector<4xf32> to vector<4x1xf32>
    %cst_47 = arith.constant 0.001953125 : f32
    %66 = vector.broadcast %cst_47 : f32 to vector<4x1xf32>
    %67 = arith.mulf %65, %66 : vector<4x1xf32>
    %68 = vector.broadcast %67 : vector<4x1xf32> to vector<4x512xf32>
    %69 = arith.subf %63, %68 : vector<4x512xf32>
    %70 = arith.mulf %69, %69 : vector<4x512xf32>
    %cst_48 = arith.constant dense<0.000000e+00> : vector<4xf32>
    %71 = vector.multi_reduction <add>, %70, %cst_48 [1] : vector<4x512xf32> to vector<4xf32>
    %72 = vector.shape_cast %71 : vector<4xf32> to vector<4x1xf32>
    %cst_49 = arith.constant 0.001953125 : f32
    %73 = vector.broadcast %cst_49 : f32 to vector<4x1xf32>
    %74 = arith.mulf %72, %73 : vector<4x1xf32>
    %c0_50 = arith.constant 0 : index
    %c0_51 = arith.constant 0 : index
    %75 = vector.load %arg7[%c0_50, %c0_51] : memref<4x1xf32, #tpu.memory_space<vmem>>, vector<4x1xf32>
    %cst_52 = arith.constant 9.99999974E-6 : f32
    %76 = vector.broadcast %cst_52 : f32 to vector<4x1xf32>
    %77 = arith.addf %74, %76 : vector<4x1xf32>
    %78 = math.rsqrt %77 : vector<4x1xf32>
    %79 = arith.mulf %75, %78 : vector<4x1xf32>
    %80 = vector.broadcast %79 : vector<4x1xf32> to vector<4x512xf32>
    %81 = arith.mulf %69, %80 : vector<4x512xf32>
    %c0_53 = arith.constant 0 : index
    %c0_54 = arith.constant 0 : index
    %82 = vector.load %arg8[%c0_53, %c0_54] : memref<4x1xf32, #tpu.memory_space<vmem>>, vector<4x1xf32>
    %83 = vector.broadcast %82 : vector<4x1xf32> to vector<4x512xf32>
    %84 = arith.addf %81, %83 : vector<4x512xf32>
    %cst_55 = arith.constant 0.000000e+00 : f32
    %85 = vector.broadcast %cst_55 : f32 to vector<4x512xf32>
    %86 = arith.maximumf %84, %85 : vector<4x512xf32>
    %c17_i32_56 = arith.constant 17 : i32
    %87 = tpu.dynamic_rotate %86 by %c17_i32_56 dim 1 : vector<4x512xf32>, i32 -> vector<4x512xf32>
    %c0_57 = arith.constant 0 : index
    %c0_58 = arith.constant 0 : index
    %88 = vector.load %arg4[%c0_57, %c0_58] : memref<9x512xf32, #tpu.memory_space<vmem>>, vector<1x512xf32>
    %89 = vector.broadcast %88 : vector<1x512xf32> to vector<4x512xf32>
    %90 = arith.mulf %87, %89 : vector<4x512xf32>
    %c0_59 = arith.constant 0 : index
    %c0_60 = arith.constant 0 : index
    %91 = vector.load %arg15[%c0_59, %c0_60] : memref<72x512xf32, #tpu.memory_space<vmem>>, vector<4x512xf32>
    tpu.vector_store %arg15[%c0_59, %c0_60], %90 {strides = array<i32>} : memref<72x512xf32, #tpu.memory_space<vmem>>, vector<4x512xf32>,
    %c16_i32_61 = arith.constant 16 : i32
    %92 = tpu.dynamic_rotate %86 by %c16_i32_61 dim 1 : vector<4x512xf32>, i32 -> vector<4x512xf32>
    %c1_62 = arith.constant 1 : index
    %c0_63 = arith.constant 0 : index
    %93 = vector.load %arg4[%c1_62, %c0_63] : memref<9x512xf32, #tpu.memory_space<vmem>>, vector<1x512xf32>
    %94 = vector.broadcast %93 : vector<1x512xf32> to vector<4x512xf32>
    %95 = arith.mulf %92, %94 : vector<4x512xf32>
    %c4_64 = arith.constant 4 : index
    %c0_65 = arith.constant 0 : index
    %96 = vector.load %arg15[%c4_64, %c0_65] : memref<72x512xf32, #tpu.memory_space<vmem>>, vector<4x512xf32>
    tpu.vector_store %arg15[%c4_64, %c0_65], %95 {strides = array<i32>} : memref<72x512xf32, #tpu.memory_space<vmem>>, vector<4x512xf32>,
    %c15_i32_66 = arith.constant 15 : i32
    %97 = tpu.dynamic_rotate %86 by %c15_i32_66 dim 1 : vector<4x512xf32>, i32 -> vector<4x512xf32>
    %c2_67 = arith.constant 2 : index
    %c0_68 = arith.constant 0 : index
    %98 = vector.load %arg4[%c2_67, %c0_68] : memref<9x512xf32, #tpu.memory_space<vmem>>, vector<1x512xf32>
    %99 = vector.broadcast %98 : vector<1x512xf32> to vector<4x512xf32>
    %100 = arith.mulf %97, %99 : vector<4x512xf32>
    %c8_69 = arith.constant 8 : index
    %c0_70 = arith.constant 0 : index
    %101 = vector.load %arg15[%c8_69, %c0_70] : memref<72x512xf32, #tpu.memory_space<vmem>>, vector<4x512xf32>
    tpu.vector_store %arg15[%c8_69, %c0_70], %100 {strides = array<i32>} : memref<72x512xf32, #tpu.memory_space<vmem>>, vector<4x512xf32>,
    %c1_i32_71 = arith.constant 1 : i32
    %102 = tpu.dynamic_rotate %86 by %c1_i32_71 dim 1 : vector<4x512xf32>, i32 -> vector<4x512xf32>
    %c3_72 = arith.constant 3 : index
    %c0_73 = arith.constant 0 : index
    %103 = vector.load %arg4[%c3_72, %c0_73] : memref<9x512xf32, #tpu.memory_space<vmem>>, vector<1x512xf32>
    %104 = vector.broadcast %103 : vector<1x512xf32> to vector<4x512xf32>
    %105 = arith.mulf %102, %104 : vector<4x512xf32>
    %c12 = arith.constant 12 : index
    %c0_74 = arith.constant 0 : index
    %106 = vector.load %arg15[%c12, %c0_74] : memref<72x512xf32, #tpu.memory_space<vmem>>, vector<4x512xf32>
    tpu.vector_store %arg15[%c12, %c0_74], %105 {strides = array<i32>} : memref<72x512xf32, #tpu.memory_space<vmem>>, vector<4x512xf32>,
    %c4_75 = arith.constant 4 : index
    %c0_76 = arith.constant 0 : index
    %107 = vector.load %arg4[%c4_75, %c0_76] : memref<9x512xf32, #tpu.memory_space<vmem>>, vector<1x512xf32>
    %108 = vector.broadcast %107 : vector<1x512xf32> to vector<4x512xf32>
    %109 = arith.mulf %86, %108 : vector<4x512xf32>
    %c16_77 = arith.constant 16 : index
    %c0_78 = arith.constant 0 : index
    %110 = vector.load %arg15[%c16_77, %c0_78] : memref<72x512xf32, #tpu.memory_space<vmem>>, vector<4x512xf32>
    tpu.vector_store %arg15[%c16_77, %c0_78], %109 {strides = array<i32>} : memref<72x512xf32, #tpu.memory_space<vmem>>, vector<4x512xf32>,
    %c511_i32_79 = arith.constant 511 : i32
    %111 = tpu.dynamic_rotate %86 by %c511_i32_79 dim 1 : vector<4x512xf32>, i32 -> vector<4x512xf32>
    %c5_80 = arith.constant 5 : index
    %c0_81 = arith.constant 0 : index
    %112 = vector.load %arg4[%c5_80, %c0_81] : memref<9x512xf32, #tpu.memory_space<vmem>>, vector<1x512xf32>
    %113 = vector.broadcast %112 : vector<1x512xf32> to vector<4x512xf32>
    %114 = arith.mulf %111, %113 : vector<4x512xf32>
    %c20 = arith.constant 20 : index
    %c0_82 = arith.constant 0 : index
    %115 = vector.load %arg15[%c20, %c0_82] : memref<72x512xf32, #tpu.memory_space<vmem>>, vector<4x512xf32>
    tpu.vector_store %arg15[%c20, %c0_82], %114 {strides = array<i32>} : memref<72x512xf32, #tpu.memory_space<vmem>>, vector<4x512xf32>,
    %c497_i32_83 = arith.constant 497 : i32
    %116 = tpu.dynamic_rotate %86 by %c497_i32_83 dim 1 : vector<4x512xf32>, i32 -> vector<4x512xf32>
    %c6_84 = arith.constant 6 : index
    %c0_85 = arith.constant 0 : index
    %117 = vector.load %arg4[%c6_84, %c0_85] : memref<9x512xf32, #tpu.memory_space<vmem>>, vector<1x512xf32>
    %118 = vector.broadcast %117 : vector<1x512xf32> to vector<4x512xf32>
    %119 = arith.mulf %116, %118 : vector<4x512xf32>
    %c24_86 = arith.constant 24 : index
    %c0_87 = arith.constant 0 : index
    %120 = vector.load %arg15[%c24_86, %c0_87] : memref<72x512xf32, #tpu.memory_space<vmem>>, vector<4x512xf32>
    tpu.vector_store %arg15[%c24_86, %c0_87], %119 {strides = array<i32>} : memref<72x512xf32, #tpu.memory_space<vmem>>, vector<4x512xf32>,
    %c496_i32_88 = arith.constant 496 : i32
    %121 = tpu.dynamic_rotate %86 by %c496_i32_88 dim 1 : vector<4x512xf32>, i32 -> vector<4x512xf32>
    %c7_89 = arith.constant 7 : index
    %c0_90 = arith.constant 0 : index
    %122 = vector.load %arg4[%c7_89, %c0_90] : memref<9x512xf32, #tpu.memory_space<vmem>>, vector<1x512xf32>
    %123 = vector.broadcast %122 : vector<1x512xf32> to vector<4x512xf32>
    %124 = arith.mulf %121, %123 : vector<4x512xf32>
    %c28 = arith.constant 28 : index
    %c0_91 = arith.constant 0 : index
    %125 = vector.load %arg15[%c28, %c0_91] : memref<72x512xf32, #tpu.memory_space<vmem>>, vector<4x512xf32>
    tpu.vector_store %arg15[%c28, %c0_91], %124 {strides = array<i32>} : memref<72x512xf32, #tpu.memory_space<vmem>>, vector<4x512xf32>,
    %c495_i32_92 = arith.constant 495 : i32
    %126 = tpu.dynamic_rotate %86 by %c495_i32_92 dim 1 : vector<4x512xf32>, i32 -> vector<4x512xf32>
    %c8_93 = arith.constant 8 : index
    %c0_94 = arith.constant 0 : index
    %127 = vector.load %arg4[%c8_93, %c0_94] : memref<9x512xf32, #tpu.memory_space<vmem>>, vector<1x512xf32>
    %128 = vector.broadcast %127 : vector<1x512xf32> to vector<4x512xf32>
    %129 = arith.mulf %126, %128 : vector<4x512xf32>
    %c32_95 = arith.constant 32 : index
    %c0_96 = arith.constant 0 : index
    %130 = vector.load %arg15[%c32_95, %c0_96] : memref<72x512xf32, #tpu.memory_space<vmem>>, vector<4x512xf32>
    tpu.vector_store %arg15[%c32_95, %c0_96], %129 {strides = array<i32>} : memref<72x512xf32, #tpu.memory_space<vmem>>, vector<4x512xf32>,
    %c0_97 = arith.constant 0 : index
    %c0_98 = arith.constant 0 : index
    %131 = vector.load %arg9[%c0_97, %c0_98] : memref<4x36xf32, #tpu.memory_space<vmem>>, vector<4x36xf32>
    %c0_99 = arith.constant 0 : index
    %c0_100 = arith.constant 0 : index
    %132 = vector.load %arg15[%c0_99, %c0_100] : memref<72x512xf32, #tpu.memory_space<vmem>>, vector<36x512xf32>
    %cst_101 = arith.constant dense<0.000000e+00> : vector<4x512xf32>
    %133 = tpu.matmul %131, %132, %cst_101 {dimension_numbers = #tpu.dot_dimension_numbers<[1], [0], [0], [1], [0, 0, 1, 1], [], []>} : vector<4x36xf32>, vector<36x512xf32>, vector<4x512xf32> -> vector<4x512xf32>
    %c0_102 = arith.constant 0 : index
    %c0_103 = arith.constant 0 : index
    %134 = vector.load %arg10[%c0_102, %c0_103] : memref<4x1xf32, #tpu.memory_space<vmem>>, vector<4x1xf32>
    %135 = vector.broadcast %134 : vector<4x1xf32> to vector<4x512xf32>
    %136 = arith.addf %133, %135 : vector<4x512xf32>
    %cst_104 = arith.constant dense<0.000000e+00> : vector<4xf32>
    %137 = vector.multi_reduction <add>, %136, %cst_104 [1] : vector<4x512xf32> to vector<4xf32>
    %138 = vector.shape_cast %137 : vector<4xf32> to vector<4x1xf32>
    %cst_105 = arith.constant 0.001953125 : f32
    %139 = vector.broadcast %cst_105 : f32 to vector<4x1xf32>
    %140 = arith.mulf %138, %139 : vector<4x1xf32>
    %141 = vector.broadcast %140 : vector<4x1xf32> to vector<4x512xf32>
    %142 = arith.subf %136, %141 : vector<4x512xf32>
    %143 = arith.mulf %142, %142 : vector<4x512xf32>
    %cst_106 = arith.constant dense<0.000000e+00> : vector<4xf32>
    %144 = vector.multi_reduction <add>, %143, %cst_106 [1] : vector<4x512xf32> to vector<4xf32>
    %145 = vector.shape_cast %144 : vector<4xf32> to vector<4x1xf32>
    %cst_107 = arith.constant 0.001953125 : f32
    %146 = vector.broadcast %cst_107 : f32 to vector<4x1xf32>
    %147 = arith.mulf %145, %146 : vector<4x1xf32>
    %c0_108 = arith.constant 0 : index
    %c0_109 = arith.constant 0 : index
    %148 = vector.load %arg11[%c0_108, %c0_109] : memref<4x1xf32, #tpu.memory_space<vmem>>, vector<4x1xf32>
    %cst_110 = arith.constant 9.99999974E-6 : f32
    %149 = vector.broadcast %cst_110 : f32 to vector<4x1xf32>
    %150 = arith.addf %147, %149 : vector<4x1xf32>
    %151 = math.rsqrt %150 : vector<4x1xf32>
    %152 = arith.mulf %148, %151 : vector<4x1xf32>
    %153 = vector.broadcast %152 : vector<4x1xf32> to vector<4x512xf32>
    %154 = arith.mulf %142, %153 : vector<4x512xf32>
    %c0_111 = arith.constant 0 : index
    %c0_112 = arith.constant 0 : index
    %155 = vector.load %arg12[%c0_111, %c0_112] : memref<4x1xf32, #tpu.memory_space<vmem>>, vector<4x1xf32>
    %156 = vector.broadcast %155 : vector<4x1xf32> to vector<4x512xf32>
    %157 = arith.addf %154, %156 : vector<4x512xf32>
    %cst_113 = arith.constant 0.000000e+00 : f32
    %158 = vector.broadcast %cst_113 : f32 to vector<4x512xf32>
    %159 = arith.maximumf %157, %158 : vector<4x512xf32>
    %160 = vector.extract_strided_slice %159 {offsets = [0, 0], sizes = [4, 256], strides = [1, 1]} : vector<4x512xf32> to vector<4x256xf32>
    %c0_114 = arith.constant 0 : index
    %c0_115 = arith.constant 0 : index
    %c0_116 = arith.constant 0 : index
    %161 = vector.load %arg13[%c0_114, %c0_115, %c0_116] : memref<2x4x256xf32, #tpu.memory_space<vmem>>, vector<1x4x256xf32>
    %162 = vector.shape_cast %161 : vector<1x4x256xf32> to vector<4x256xf32>
    %163 = vector.shape_cast %160 : vector<4x256xf32> to vector<1x4x256xf32>
    tpu.vector_store %arg13[%c0_114, %c0_115, %c0_116], %163 {strides = array<i32>} : memref<2x4x256xf32, #tpu.memory_space<vmem>>, vector<1x4x256xf32>,
    %164 = vector.extract_strided_slice %159 {offsets = [0, 256], sizes = [4, 256], strides = [1, 1]} : vector<4x512xf32> to vector<4x256xf32>
    %c1_117 = arith.constant 1 : index
    %c0_118 = arith.constant 0 : index
    %c0_119 = arith.constant 0 : index
    %165 = vector.load %arg13[%c1_117, %c0_118, %c0_119] : memref<2x4x256xf32, #tpu.memory_space<vmem>>, vector<1x4x256xf32>
    %166 = vector.shape_cast %165 : vector<1x4x256xf32> to vector<4x256xf32>
    %167 = vector.shape_cast %164 : vector<4x256xf32> to vector<1x4x256xf32>
    tpu.vector_store %arg13[%c1_117, %c0_118, %c0_119], %167 {strides = array<i32>} : memref<2x4x256xf32, #tpu.memory_space<vmem>>, vector<1x4x256xf32>,
    return
  }
  func.func @transform_0(%arg0: i32) -> (i32, i32) {
    %c0_i32 = arith.constant 0 : i32
    %c0_i32_0 = arith.constant 0 : i32
    %c0_i32_1 = arith.constant 0 : i32
    return %c0_i32, %c0_i32_0 : i32, i32
  }
  func.func @transform_1(%arg0: i32) -> (i32, i32, i32) {
    %c0_i32 = arith.constant 0 : i32
    %c0_i32_0 = arith.constant 0 : i32
    %c0_i32_1 = arith.constant 0 : i32
    %c0_i32_2 = arith.constant 0 : i32
    return %c0_i32, %c0_i32_0, %c0_i32_1 : i32, i32, i32
  }
  func.func @transform_2(%arg0: i32) -> (i32, i32) {
    %c0_i32 = arith.constant 0 : i32
    %c0_i32_0 = arith.constant 0 : i32
    %c0_i32_1 = arith.constant 0 : i32
    return %c0_i32, %c0_i32_0 : i32, i32
  }
  func.func @transform_3(%arg0: i32) -> (i32, i32) {
    %c0_i32 = arith.constant 0 : i32
    %c0_i32_0 = arith.constant 0 : i32
    %c0_i32_1 = arith.constant 0 : i32
    return %c0_i32, %c0_i32_0 : i32, i32
  }
  func.func @transform_4(%arg0: i32) -> (i32, i32) {
    %c0_i32 = arith.constant 0 : i32
    %c0_i32_0 = arith.constant 0 : i32
    %c0_i32_1 = arith.constant 0 : i32
    return %c0_i32, %c0_i32_0 : i32, i32
  }
  func.func @transform_5(%arg0: i32) -> (i32, i32) {
    %c0_i32 = arith.constant 0 : i32
    %c0_i32_0 = arith.constant 0 : i32
    %c0_i32_1 = arith.constant 0 : i32
    return %c0_i32, %c0_i32_0 : i32, i32
  }
  func.func @transform_6(%arg0: i32) -> (i32, i32) {
    %c0_i32 = arith.constant 0 : i32
    %c0_i32_0 = arith.constant 0 : i32
    %c0_i32_1 = arith.constant 0 : i32
    return %c0_i32, %c0_i32_0 : i32, i32
  }
  func.func @transform_7(%arg0: i32) -> (i32, i32) {
    %c0_i32 = arith.constant 0 : i32
    %c0_i32_0 = arith.constant 0 : i32
    %c0_i32_1 = arith.constant 0 : i32
    return %c0_i32, %c0_i32_0 : i32, i32
  }
  func.func @transform_8(%arg0: i32) -> (i32, i32) {
    %c0_i32 = arith.constant 0 : i32
    %c0_i32_0 = arith.constant 0 : i32
    %c0_i32_1 = arith.constant 0 : i32
    return %c0_i32, %c0_i32_0 : i32, i32
  }
  func.func @transform_9(%arg0: i32) -> (i32, i32) {
    %c0_i32 = arith.constant 0 : i32
    %c0_i32_0 = arith.constant 0 : i32
    %c0_i32_1 = arith.constant 0 : i32
    return %c0_i32, %c0_i32_0 : i32, i32
  }
  func.func @transform_10(%arg0: i32) -> (i32, i32) {
    %c0_i32 = arith.constant 0 : i32
    %c0_i32_0 = arith.constant 0 : i32
    %c0_i32_1 = arith.constant 0 : i32
    return %c0_i32, %c0_i32_0 : i32, i32
  }
  func.func @transform_11(%arg0: i32) -> (i32, i32) {
    %c0_i32 = arith.constant 0 : i32
    %c0_i32_0 = arith.constant 0 : i32
    %c0_i32_1 = arith.constant 0 : i32
    return %c0_i32, %c0_i32_0 : i32, i32
  }
  func.func @transform_12(%arg0: i32) -> (i32, i32, i32) {
    %c0_i32 = arith.constant 0 : i32
    %c0_i32_0 = arith.constant 0 : i32
    %c0_i32_1 = arith.constant 0 : i32
    %c0_i32_2 = arith.constant 0 : i32
    return %c0_i32, %c0_i32_0, %c0_i32_1 : i32, i32, i32
  }
}

</mosaic_0001>

<llo_original>
// kernel: up_forward.1
$region0: #{up_forward.1}
  #allocation0 [shape = 'u32[]', space=smem, size = 0x4, offset = 0x4, fixed_abs, tag = 'smem constant byte address 0x4 - core index']
  #allocation1 [shape = 'u32[72,128]{1,0:T(1,128)}', space=vmem, size = 0x9000, scoped, tag = 'internal scratch']
  #allocation2 [shape = 'f32[8,512]{1,0:T(8,128)}', space=vmem, size = 0x4000, scoped, tag = 'scratch operand']
  #allocation3 [shape = 'f32[72,512]{1,0:T(8,128)}', space=vmem, size = 0x24000, scoped, tag = 'scratch operand']
  %s0 = inlined_call_operand.vmem [shape: f32[8,64], index: 0, kind: input, shape index: {}]
  %s1 = inlined_call_operand.vmem [shape: f32[2,4,256], index: 1, kind: input, shape index: {}]
  %s2 = inlined_call_operand.vmem [shape: f32[64,256], index: 2, kind: input, shape index: {}]
  %s3 = inlined_call_operand.vmem [shape: f32[9,512], index: 3, kind: input, shape index: {}]
  %s4 = inlined_call_operand.vmem [shape: f32[4,72], index: 4, kind: input, shape index: {}]
  %s5 = inlined_call_operand.vmem [shape: f32[4,1], index: 5, kind: input, shape index: {}]
  %s6 = inlined_call_operand.vmem [shape: f32[4,1], index: 6, kind: input, shape index: {}]
  %s7 = inlined_call_operand.vmem [shape: f32[4,1], index: 7, kind: input, shape index: {}]
  %s8 = inlined_call_operand.vmem [shape: f32[4,36], index: 8, kind: input, shape index: {}]
  %s9 = inlined_call_operand.vmem [shape: f32[4,1], index: 9, kind: input, shape index: {}]
  %s10 = inlined_call_operand.vmem [shape: f32[4,1], index: 10, kind: input, shape index: {}]
  %s11 = inlined_call_operand.vmem [shape: f32[4,1], index: 11, kind: input, shape index: {}]
  %s12 = inlined_call_operand.vmem [shape: f32[2,4,256], index: 12, kind: output, shape index: {}]
  %s13 = sld [smem:[#allocation0]]
  $region58: #{up_forward.1} parent=0
    _
  %s15 = ssub.s32 1, %s13
  %s16 = scalar_select 0, %s15, %s13
  // Predicated region
  $region2: #{up_forward.1} parent=0 // pred_check
    _
  $region3: #{up_forward.1} parent=0 // pred_check_branch
    %18 = sbr.rel (0) target = $region5
  $region4: #{up_forward.1} parent=0 // pred_region
    _
  $region5: #{up_forward.1} parent=0 // pred_fallthru
    _
  // Predicated region
  $region6: #{up_forward.1} parent=0 // pred_check
    _
  $region7: #{up_forward.1} parent=0 // pred_check_branch
    %20 = sbr.rel (0) target = $region9
  $region8: #{up_forward.1} parent=0 // pred_region
    _
  $region9: #{up_forward.1} parent=0 // pred_fallthru
    _
  // Predicated region
  $region10: #{up_forward.1} parent=0 // pred_check
    _
  $region11: #{up_forward.1} parent=0 // pred_check_branch
    %22 = sbr.rel (0) target = $region13
  $region12: #{up_forward.1} parent=0 // pred_region
    _
  $region13: #{up_forward.1} parent=0 // pred_fallthru
    _
  // Predicated region
  $region14: #{up_forward.1} parent=0 // pred_check
    _
  $region15: #{up_forward.1} parent=0 // pred_check_branch
    %24 = sbr.rel (0) target = $region17
  $region16: #{up_forward.1} parent=0 // pred_region
    _
  $region17: #{up_forward.1} parent=0 // pred_fallthru
    _
  // Predicated region
  $region18: #{up_forward.1} parent=0 // pred_check
    _
  $region19: #{up_forward.1} parent=0 // pred_check_branch
    %26 = sbr.rel (0) target = $region21
  $region20: #{up_forward.1} parent=0 // pred_region
    _
  $region21: #{up_forward.1} parent=0 // pred_fallthru
    _
  // Predicated region
  $region22: #{up_forward.1} parent=0 // pred_check
    _
  $region23: #{up_forward.1} parent=0 // pred_check_branch
    %28 = sbr.rel (0) target = $region25
  $region24: #{up_forward.1} parent=0 // pred_region
    _
  $region25: #{up_forward.1} parent=0 // pred_fallthru
    _
  // Predicated region
  $region26: #{up_forward.1} parent=0 // pred_check
    _
  $region27: #{up_forward.1} parent=0 // pred_check_branch
    %30 = sbr.rel (0) target = $region29
  $region28: #{up_forward.1} parent=0 // pred_region
    _
  $region29: #{up_forward.1} parent=0 // pred_fallthru
    _
  // Predicated region
  $region30: #{up_forward.1} parent=0 // pred_check
    _
  $region31: #{up_forward.1} parent=0 // pred_check_branch
    %32 = sbr.rel (0) target = $region33
  $region32: #{up_forward.1} parent=0 // pred_region
    _
  $region33: #{up_forward.1} parent=0 // pred_fallthru
    _
  // Predicated region
  $region34: #{up_forward.1} parent=0 // pred_check
    _
  $region35: #{up_forward.1} parent=0 // pred_check_branch
    %34 = sbr.rel (0) target = $region37
  $region36: #{up_forward.1} parent=0 // pred_region
    _
  $region37: #{up_forward.1} parent=0 // pred_fallthru
    _
  // Predicated region
  $region38: #{up_forward.1} parent=0 // pred_check
    _
  $region39: #{up_forward.1} parent=0 // pred_check_branch
    %36 = sbr.rel (0) target = $region41
  $region40: #{up_forward.1} parent=0 // pred_region
    _
  $region41: #{up_forward.1} parent=0 // pred_fallthru
    _
  // Predicated region
  $region42: #{up_forward.1} parent=0 // pred_check
    _
  $region43: #{up_forward.1} parent=0 // pred_check_branch
    %38 = sbr.rel (0) target = $region45
  $region44: #{up_forward.1} parent=0 // pred_region
    _
  $region45: #{up_forward.1} parent=0 // pred_fallthru
    _
  // Predicated region
  $region46: #{up_forward.1} parent=0 // pred_check
    _
  $region47: #{up_forward.1} parent=0 // pred_check_branch
    %40 = sbr.rel (0) target = $region49
  $region48: #{up_forward.1} parent=0 // pred_region
    _
  $region49: #{up_forward.1} parent=0 // pred_fallthru
    _
  %v41 = vld [vmem:[%s0] sm:$0xff]
  %v42 = vld [vmem:[%s2] sm:$0xff]
  %v43 = vld [vmem:[%s2 + $0x8] sm:$0xff]
  %v44 = vld [vmem:[%s2 + $0x10] sm:$0xff]
  %v45 = vld [vmem:[%s2 + $0x18] sm:$0xff]
  %v46 = vld [vmem:[%s2 + $0x20] sm:$0xff]
  %v47 = vld [vmem:[%s2 + $0x28] sm:$0xff]
  %v48 = vld [vmem:[%s2 + $0x30] sm:$0xff]
  %v49 = vld [vmem:[%s2 + $0x38] sm:$0xff]
  %v50 = vld [vmem:[%s2 + $0x40] sm:$0xff]
  %v51 = vld [vmem:[%s2 + $0x48] sm:$0xff]
  %v52 = vld [vmem:[%s2 + $0x50] sm:$0xff]
  %v53 = vld [vmem:[%s2 + $0x58] sm:$0xff]
  %v54 = vld [vmem:[%s2 + $0x60] sm:$0xff]
  %v55 = vld [vmem:[%s2 + $0x68] sm:$0xff]
  %v56 = vld [vmem:[%s2 + $0x70] sm:$0xff]
  %v57 = vld [vmem:[%s2 + $0x78] sm:$0xff]
  %vm58 = vcmask 523264
  %v60 = vsel %vm58, %v41, 0
  %62 = vmatpush.msra.mxu0 0.0
  %63 = vmatpush.msra.mxu0 0.0
  %64 = vmatpush.msra.mxu0 0.0
  %65 = vmatpush.msra.mxu0 0.0
  %66 = vmatpush.msra.mxu0 0.0
  %67 = vmatpush.msra.mxu0 0.0
  %68 = vmatpush.msra.mxu0 0.0
  %69 = vmatpush.msra.mxu0 0.0
  %70 = vmatpush.msra.mxu0 %v56
  %71 = vmatpush.msra.mxu0 %v54
  %72 = vmatpush.msra.mxu0 %v52
  %73 = vmatpush.msra.mxu0 %v50
  %74 = vmatpush.msra.mxu0 %v48
  %75 = vmatpush.msra.mxu0 %v46
  %76 = vmatpush.msra.mxu0 %v44
  %77 = vmatpush.msra.mxu0 %v42
  %78 = vmatmul.f32.gmra.mxu0 %v60
  %v79 = vpop.f32.mrf.mxu0
  %v80 = vadd.f32 0.0, %v79
  %81 = vdwg.mxu0
  %82 = vmatpush.msra.mxu0 0.0
  %83 = vmatpush.msra.mxu0 0.0
  %84 = vmatpush.msra.mxu0 0.0
  %85 = vmatpush.msra.mxu0 0.0
  %86 = vmatpush.msra.mxu0 0.0
  %87 = vmatpush.msra.mxu0 0.0
  %88 = vmatpush.msra.mxu0 0.0
  %89 = vmatpush.msra.mxu0 0.0
  %90 = vmatpush.msra.mxu0 %v57
  %91 = vmatpush.msra.mxu0 %v55
  %92 = vmatpush.msra.mxu0 %v53
  %93 = vmatpush.msra.mxu0 %v51
  %94 = vmatpush.msra.mxu0 %v49
  %95 = vmatpush.msra.mxu0 %v47
  %96 = vmatpush.msra.mxu0 %v45
  %97 = vmatpush.msra.mxu0 %v43
  %98 = vmatmul.f32.gmra.mxu0 %v60
  %v99 = vpop.f32.mrf.mxu0
  %v100 = vadd.f32 0.0, %v99
  %101 = vdwg.mxu0
  %v102 = vld [vmem:[%s1] sm:$0xff]
  %104 = vst [vmem:[#allocation1] ss:$2 sm:$0xff] %v102
  %v105 = vld.sshfl [vmem:[#allocation1] sm:$0xff pattern:$0x75316420]
  %v106 = vld.sshfl [vmem:[#allocation1 + $0x8] sm:$0xff pattern:$0x75316420]
  %109 = vst [vmem:[#allocation2] sm:$0xf] %v105
  %110 = vst [vmem:[#allocation2 + $0x8] sm:$0xf] %v106
  %v113 = vrot.slane %v80, 4
  %v114 = vrot.slane %v100, 4
  %117 = vst [vmem:[#allocation2] sm:$0xf0] %v113
  %118 = vst [vmem:[#allocation2 + $0x8] sm:$0xf0] %v114
  %s119 = scalar_lea.vmem %s1, 8
  %v120 = vld [vmem:[%s119] sm:$0xff]
  %122 = vst [vmem:[#allocation1] ss:$2 sm:$0xff] %v120
  %v123 = vld.sshfl [vmem:[#allocation1] sm:$0xff pattern:$0x75316420]
  %v124 = vld.sshfl [vmem:[#allocation1 + $0x8] sm:$0xff pattern:$0x75316420]
  %127 = vst [vmem:[#allocation2 + $0x10] sm:$0xf] %v123
  %128 = vst [vmem:[#allocation2 + $0x18] sm:$0xf] %v124
  %129 = vst [vmem:[#allocation2 + $0x10] sm:$0xf0] %v80
  %130 = vst [vmem:[#allocation2 + $0x18] sm:$0xf0] %v100
  %v131 = vld [vmem:[#allocation2] sm:$0xff]
  %v132 = vld [vmem:[#allocation2 + $0x8] sm:$0xff]
  %v133 = vld [vmem:[#allocation2 + $0x10] sm:$0xff]
  %v134 = vld [vmem:[#allocation2 + $0x18] sm:$0xff]
  %135 = vrot.lane.b32.xlu0 %v131, 17
  %v136 = vpop.permute.xlu0 %135
  %137 = vrot.lane.b32.xlu0 %v132, 17
  %v138 = vpop.permute.xlu0 %137
  %139 = vrot.lane.b32.xlu0 %v133, 17
  %v140 = vpop.permute.xlu0 %139
  %141 = vrot.lane.b32.xlu0 %v134, 17
  %v142 = vpop.permute.xlu0 %141
  %v143 = vlaneseq
  %v144 = vand.u32 %v143, 127
  %vm145 = vcmp.lt.s32.totalorder %v144, 17
  %v146 = vsel %vm145, %v140, %v142
  %v147 = vsel %vm145, %v138, %v140
  %v148 = vsel %vm145, %v136, %v138
  %v149 = vsel %vm145, %v142, %v136
  %v150 = vld [vmem:[%s3] ss:$8 sm:$0xf]
  %v152 = vperm.slane %v150, 0
  %v153 = vperm.slane %v150, 1
  %v154 = vperm.slane %v150, 2
  %v155 = vperm.slane %v150, 3
  %v160 = vmul.f32 %v149, %v152
  %v161 = vmul.f32 %v148, %v153
  %v162 = vmul.f32 %v147, %v154
  %v163 = vmul.f32 %v146, %v155
  %164 = vst [vmem:[#allocation3] sm:$0xff] %v160
  %165 = vst [vmem:[#allocation3 + $0x8] sm:$0xff] %v161
  %166 = vst [vmem:[#allocation3 + $0x10] sm:$0xff] %v162
  %167 = vst [vmem:[#allocation3 + $0x18] sm:$0xff] %v163
  %168 = vrot.lane.b32.xlu0 %v131, 16
  %v169 = vpop.permute.xlu0 %168
  %170 = vrot.lane.b32.xlu0 %v132, 16
  %v171 = vpop.permute.xlu0 %170
  %172 = vrot.lane.b32.xlu0 %v133, 16
  %v173 = vpop.permute.xlu0 %172
  %174 = vrot.lane.b32.xlu0 %v134, 16
  %v175 = vpop.permute.xlu0 %174
  %vm176 = vcmp.lt.s32.totalorder %v144, 16
  %v177 = vsel %vm176, %v173, %v175
  %v178 = vsel %vm176, %v171, %v173
  %v179 = vsel %vm176, %v169, %v171
  %v180 = vsel %vm176, %v175, %v169
  %s181 = scalar_lea.vmem %s3, 1
  %v182 = vld [vmem:[%s181] ss:$8 sm:$0xf]
  %v184 = vperm.slane %v182, 0
  %v185 = vperm.slane %v182, 1
  %v186 = vperm.slane %v182, 2
  %v187 = vperm.slane %v182, 3
  %v192 = vmul.f32 %v180, %v184
  %v193 = vmul.f32 %v179, %v185
  %v194 = vmul.f32 %v178, %v186
  %v195 = vmul.f32 %v177, %v187
  %196 = vst [vmem:[#allocation3 + $0x20] sm:$0xff] %v192
  %197 = vst [vmem:[#allocation3 + $0x28] sm:$0xff] %v193
  %198 = vst [vmem:[#allocation3 + $0x30] sm:$0xff] %v194
  %199 = vst [vmem:[#allocation3 + $0x38] sm:$0xff] %v195
  %200 = vrot.lane.b32.xlu0 %v131, 15
  %v201 = vpop.permute.xlu0 %200
  %202 = vrot.lane.b32.xlu0 %v132, 15
  %v203 = vpop.permute.xlu0 %202
  %204 = vrot.lane.b32.xlu0 %v133, 15
  %v205 = vpop.permute.xlu0 %204
  %206 = vrot.lane.b32.xlu0 %v134, 15
  %v207 = vpop.permute.xlu0 %206
  %vm208 = vcmp.lt.s32.totalorder %v144, 15
  %v209 = vsel %vm208, %v205, %v207
  %v210 = vsel %vm208, %v203, %v205
  %v211 = vsel %vm208, %v201, %v203
  %v212 = vsel %vm208, %v207, %v201
  %s213 = scalar_lea.vmem %s3, 2
  %v214 = vld [vmem:[%s213] ss:$8 sm:$0xf]
  %v216 = vperm.slane %v214, 0
  %v217 = vperm.slane %v214, 1
  %v218 = vperm.slane %v214, 2
  %v219 = vperm.slane %v214, 3
  %v224 = vmul.f32 %v212, %v216
  %v225 = vmul.f32 %v211, %v217
  %v226 = vmul.f32 %v210, %v218
  %v227 = vmul.f32 %v209, %v219
  %228 = vst [vmem:[#allocation3 + $0x40] sm:$0xff] %v224
  %229 = vst [vmem:[#allocation3 + $0x48] sm:$0xff] %v225
  %230 = vst [vmem:[#allocation3 + $0x50] sm:$0xff] %v226
  %231 = vst [vmem:[#allocation3 + $0x58] sm:$0xff] %v227
  %232 = vrot.lane.b32.xlu0 %v131, 1
  %v233 = vpop.permute.xlu0 %232
  %234 = vrot.lane.b32.xlu0 %v132, 1
  %v235 = vpop.permute.xlu0 %234
  %236 = vrot.lane.b32.xlu0 %v133, 1
  %v237 = vpop.permute.xlu0 %236
  %238 = vrot.lane.b32.xlu0 %v134, 1
  %v239 = vpop.permute.xlu0 %238
  %vm240 = vcmp.lt.s32.totalorder %v144, 1
  %v241 = vsel %vm240, %v237, %v239
  %v242 = vsel %vm240, %v235, %v237
  %v243 = vsel %vm240, %v233, %v235
  %v244 = vsel %vm240, %v239, %v233
  %s245 = scalar_lea.vmem %s3, 3
  %v246 = vld [vmem:[%s245] ss:$8 sm:$0xf]
  %v248 = vperm.slane %v246, 0
  %v249 = vperm.slane %v246, 1
  %v250 = vperm.slane %v246, 2
  %v251 = vperm.slane %v246, 3
  %v256 = vmul.f32 %v244, %v248
  %v257 = vmul.f32 %v243, %v249
  %v258 = vmul.f32 %v242, %v250
  %v259 = vmul.f32 %v241, %v251
  %260 = vst [vmem:[#allocation3 + $0x60] sm:$0xff] %v256
  %261 = vst [vmem:[#allocation3 + $0x68] sm:$0xff] %v257
  %262 = vst [vmem:[#allocation3 + $0x70] sm:$0xff] %v258
  %263 = vst [vmem:[#allocation3 + $0x78] sm:$0xff] %v259
  %s264 = scalar_lea.vmem %s3, 4
  %v265 = vld [vmem:[%s264] ss:$8 sm:$0xf]
  %v267 = vperm.slane %v265, 0
  %v268 = vperm.slane %v265, 1
  %v269 = vperm.slane %v265, 2
  %v270 = vperm.slane %v265, 3
  %v275 = vmul.f32 %v131, %v267
  %v276 = vmul.f32 %v132, %v268
  %v277 = vmul.f32 %v133, %v269
  %v278 = vmul.f32 %v134, %v270
  %279 = vst [vmem:[#allocation3 + $0x80] sm:$0xff] %v275
  %280 = vst [vmem:[#allocation3 + $0x88] sm:$0xff] %v276
  %281 = vst [vmem:[#allocation3 + $0x90] sm:$0xff] %v277
  %282 = vst [vmem:[#allocation3 + $0x98] sm:$0xff] %v278
  %283 = vrot.lane.b32.xlu0 %v131, 127
  %v284 = vpop.permute.xlu0 %283
  %285 = vrot.lane.b32.xlu0 %v132, 127
  %v286 = vpop.permute.xlu0 %285
  %287 = vrot.lane.b32.xlu0 %v133, 127
  %v288 = vpop.permute.xlu0 %287
  %289 = vrot.lane.b32.xlu0 %v134, 127
  %v290 = vpop.permute.xlu0 %289
  %vm291 = vcmp.lt.s32.totalorder %v144, 127
  %v292 = vsel %vm291, %v288, %v290
  %v293 = vsel %vm291, %v286, %v288
  %v294 = vsel %vm291, %v284, %v286
  %v295 = vsel %vm291, %v290, %v284
  %s296 = scalar_lea.vmem %s3, 5
  %v297 = vld [vmem:[%s296] ss:$8 sm:$0xf]
  %v299 = vperm.slane %v297, 0
  %v300 = vperm.slane %v297, 1
  %v301 = vperm.slane %v297, 2
  %v302 = vperm.slane %v297, 3
  %v307 = vmul.f32 %v294, %v299
  %v308 = vmul.f32 %v293, %v300
  %v309 = vmul.f32 %v292, %v301
  %v310 = vmul.f32 %v295, %v302
  %311 = vst [vmem:[#allocation3 + $0xa0] sm:$0xff] %v307
  %312 = vst [vmem:[#allocation3 + $0xa8] sm:$0xff] %v308
  %313 = vst [vmem:[#allocation3 + $0xb0] sm:$0xff] %v309
  %314 = vst [vmem:[#allocation3 + $0xb8] sm:$0xff] %v310
  %315 = vrot.lane.b32.xlu0 %v131, 113
  %v316 = vpop.permute.xlu0 %315
  %317 = vrot.lane.b32.xlu0 %v132, 113
  %v318 = vpop.permute.xlu0 %317
  %319 = vrot.lane.b32.xlu0 %v133, 113
  %v320 = vpop.permute.xlu0 %319
  %321 = vrot.lane.b32.xlu0 %v134, 113
  %v322 = vpop.permute.xlu0 %321
  %vm323 = vcmp.lt.s32.totalorder %v144, 113
  %v324 = vsel %vm323, %v320, %v322
  %v325 = vsel %vm323, %v318, %v320
  %v326 = vsel %vm323, %v316, %v318
  %v327 = vsel %vm323, %v322, %v316
  %s328 = scalar_lea.vmem %s3, 6
  %v329 = vld [vmem:[%s328] ss:$8 sm:$0xf]
  %v331 = vperm.slane %v329, 0
  %v332 = vperm.slane %v329, 1
  %v333 = vperm.slane %v329, 2
  %v334 = vperm.slane %v329, 3
  %v339 = vmul.f32 %v326, %v331
  %v340 = vmul.f32 %v325, %v332
  %v341 = vmul.f32 %v324, %v333
  %v342 = vmul.f32 %v327, %v334
  %343 = vst [vmem:[#allocation3 + $0xc0] sm:$0xff] %v339
  %344 = vst [vmem:[#allocation3 + $0xc8] sm:$0xff] %v340
  %345 = vst [vmem:[#allocation3 + $0xd0] sm:$0xff] %v341
  %346 = vst [vmem:[#allocation3 + $0xd8] sm:$0xff] %v342
  %347 = vrot.lane.b32.xlu0 %v131, 112
  %v348 = vpop.permute.xlu0 %347
  %349 = vrot.lane.b32.xlu0 %v132, 112
  %v350 = vpop.permute.xlu0 %349
  %351 = vrot.lane.b32.xlu0 %v133, 112
  %v352 = vpop.permute.xlu0 %351
  %353 = vrot.lane.b32.xlu0 %v134, 112
  %v354 = vpop.permute.xlu0 %353
  %vm355 = vcmp.lt.s32.totalorder %v144, 112
  %v356 = vsel %vm355, %v352, %v354
  %v357 = vsel %vm355, %v350, %v352
  %v358 = vsel %vm355, %v348, %v350
  %v359 = vsel %vm355, %v354, %v348
  %s360 = scalar_lea.vmem %s3, 7
  %v361 = vld [vmem:[%s360] ss:$8 sm:$0xf]
  %v363 = vperm.slane %v361, 0
  %v364 = vperm.slane %v361, 1
  %v365 = vperm.slane %v361, 2
  %v366 = vperm.slane %v361, 3
  %v371 = vmul.f32 %v358, %v363
  %v372 = vmul.f32 %v357, %v364
  %v373 = vmul.f32 %v356, %v365
  %v374 = vmul.f32 %v359, %v366
  %375 = vst [vmem:[#allocation3 + $0xe0] sm:$0xff] %v371
  %376 = vst [vmem:[#allocation3 + $0xe8] sm:$0xff] %v372
  %377 = vst [vmem:[#allocation3 + $0xf0] sm:$0xff] %v373
  %378 = vst [vmem:[#allocation3 + $0xf8] sm:$0xff] %v374
  %379 = vrot.lane.b32.xlu0 %v131, 111
  %v380 = vpop.permute.xlu0 %379
  %381 = vrot.lane.b32.xlu0 %v132, 111
  %v382 = vpop.permute.xlu0 %381
  %383 = vrot.lane.b32.xlu0 %v133, 111
  %v384 = vpop.permute.xlu0 %383
  %385 = vrot.lane.b32.xlu0 %v134, 111
  %v386 = vpop.permute.xlu0 %385
  %vm387 = vcmp.lt.s32.totalorder %v144, 111
  %v388 = vsel %vm387, %v384, %v386
  %v389 = vsel %vm387, %v382, %v384
  %v390 = vsel %vm387, %v380, %v382
  %v391 = vsel %vm387, %v386, %v380
  %s392 = scalar_lea.vmem %s3, 32
  %v393 = vld [vmem:[%s392] ss:$8 sm:$0xf]
  %v395 = vperm.slane %v393, 0
  %v396 = vperm.slane %v393, 1
  %v397 = vperm.slane %v393, 2
  %v398 = vperm.slane %v393, 3
  %v403 = vmul.f32 %v390, %v395
  %v404 = vmul.f32 %v389, %v396
  %v405 = vmul.f32 %v388, %v397
  %v406 = vmul.f32 %v391, %v398
  %407 = vst [vmem:[#allocation3 + $0x100] sm:$0xff] %v403
  %408 = vst [vmem:[#allocation3 + $0x108] sm:$0xff] %v404
  %409 = vst [vmem:[#allocation3 + $0x110] sm:$0xff] %v405
  %410 = vst [vmem:[#allocation3 + $0x118] sm:$0xff] %v406
  %v411 = vld [vmem:[%s4] sm:$0xf]
  %v412 = vld [vmem:[#allocation3] sm:$0xff]
  %v413 = vld [vmem:[#allocation3 + $0x8] sm:$0xff]
  %v414 = vld [vmem:[#allocation3 + $0x10] sm:$0xff]
  %v415 = vld [vmem:[#allocation3 + $0x18] sm:$0xff]
  %v416 = vld [vmem:[#allocation3 + $0x20] sm:$0xff]
  %v417 = vld [vmem:[#allocation3 + $0x28] sm:$0xff]
  %v418 = vld [vmem:[#allocation3 + $0x30] sm:$0xff]
  %v419 = vld [vmem:[#allocation3 + $0x38] sm:$0xff]
  %v420 = vld [vmem:[#allocation3 + $0x40] sm:$0xff]
  %v421 = vld [vmem:[#allocation3 + $0x48] sm:$0xff]
  %v422 = vld [vmem:[#allocation3 + $0x50] sm:$0xff]
  %v423 = vld [vmem:[#allocation3 + $0x58] sm:$0xff]
  %v424 = vld [vmem:[#allocation3 + $0x60] sm:$0xff]
  %v425 = vld [vmem:[#allocation3 + $0x68] sm:$0xff]
  %v426 = vld [vmem:[#allocation3 + $0x70] sm:$0xff]
  %v427 = vld [vmem:[#allocation3 + $0x78] sm:$0xff]
  %v428 = vld [vmem:[#allocation3 + $0x80] sm:$0xff]
  %v429 = vld [vmem:[#allocation3 + $0x88] sm:$0xff]
  %v430 = vld [vmem:[#allocation3 + $0x90] sm:$0xff]
  %v431 = vld [vmem:[#allocation3 + $0x98] sm:$0xff]
  %v432 = vld [vmem:[#allocation3 + $0xa0] sm:$0xff]
  %v433 = vld [vmem:[#allocation3 + $0xa8] sm:$0xff]
  %v434 = vld [vmem:[#allocation3 + $0xb0] sm:$0xff]
  %v435 = vld [vmem:[#allocation3 + $0xb8] sm:$0xff]
  %v436 = vld [vmem:[#allocation3 + $0xc0] sm:$0xff]
  %v437 = vld [vmem:[#allocation3 + $0xc8] sm:$0xff]
  %v438 = vld [vmem:[#allocation3 + $0xd0] sm:$0xff]
  %v439 = vld [vmem:[#allocation3 + $0xd8] sm:$0xff]
  %v440 = vld [vmem:[#allocation3 + $0xe0] sm:$0xff]
  %v441 = vld [vmem:[#allocation3 + $0xe8] sm:$0xff]
  %v442 = vld [vmem:[#allocation3 + $0xf0] sm:$0xff]
  %v443 = vld [vmem:[#allocation3 + $0xf8] sm:$0xff]
  %v444 = vld [vmem:[#allocation3 + $0x100] sm:$0xff]
  %v445 = vld [vmem:[#allocation3 + $0x108] sm:$0xff]
  %v446 = vld [vmem:[#allocation3 + $0x110] sm:$0xff]
  %v447 = vld [vmem:[#allocation3 + $0x118] sm:$0xff]
  %v448 = vld [vmem:[%s5] sm:$0xf]
  %450 = vset.pattern.permute.xlu0 0
  %451 = vperm.xlu0 %450, %v448
  %v452 = vpop.permute.xlu0 %451
  %vm454 = vcmask 588800
  %v456 = vsel %vm454, %v411, 0
  %458 = vmatpush.msra.mxu0 0.0
  %459 = vmatpush.msra.mxu0 0.0
  %460 = vmatpush.msra.mxu0 0.0
  %461 = vmatpush.msra.mxu0 0.0
  %462 = vmatpush.msra.mxu0 0.0
  %463 = vmatpush.msra.mxu0 0.0
  %464 = vmatpush.msra.mxu0 0.0
  %465 = vmatpush.msra.mxu0 %v444
  %466 = vmatpush.msra.mxu0 %v440
  %467 = vmatpush.msra.mxu0 %v436
  %468 = vmatpush.msra.mxu0 %v432
  %469 = vmatpush.msra.mxu0 %v428
  %470 = vmatpush.msra.mxu0 %v424
  %471 = vmatpush.msra.mxu0 %v420
  %472 = vmatpush.msra.mxu0 %v416
  %473 = vmatpush.msra.mxu0 %v412
  %474 = vmatmul.f32.gmra.mxu0 %v456
  %v475 = vpop.f32.mrf.mxu0
  %v476 = vadd.f32 %v452, %v475
  %477 = vdwg.mxu0
  %478 = vmatpush.msra.mxu0 0.0
  %479 = vmatpush.msra.mxu0 0.0
  %480 = vmatpush.msra.mxu0 0.0
  %481 = vmatpush.msra.mxu0 0.0
  %482 = vmatpush.msra.mxu0 0.0
  %483 = vmatpush.msra.mxu0 0.0
  %484 = vmatpush.msra.mxu0 0.0
  %485 = vmatpush.msra.mxu0 %v445
  %486 = vmatpush.msra.mxu0 %v441
  %487 = vmatpush.msra.mxu0 %v437
  %488 = vmatpush.msra.mxu0 %v433
  %489 = vmatpush.msra.mxu0 %v429
  %490 = vmatpush.msra.mxu0 %v425
  %491 = vmatpush.msra.mxu0 %v421
  %492 = vmatpush.msra.mxu0 %v417
  %493 = vmatpush.msra.mxu0 %v413
  %494 = vmatmul.f32.gmra.mxu0 %v456
  %v495 = vpop.f32.mrf.mxu0
  %v496 = vadd.f32 %v452, %v495
  %497 = vdwg.mxu0
  %498 = vmatpush.msra.mxu0 0.0
  %499 = vmatpush.msra.mxu0 0.0
  %500 = vmatpush.msra.mxu0 0.0
  %501 = vmatpush.msra.mxu0 0.0
  %502 = vmatpush.msra.mxu0 0.0
  %503 = vmatpush.msra.mxu0 0.0
  %504 = vmatpush.msra.mxu0 0.0
  %505 = vmatpush.msra.mxu0 %v446
  %506 = vmatpush.msra.mxu0 %v442
  %507 = vmatpush.msra.mxu0 %v438
  %508 = vmatpush.msra.mxu0 %v434
  %509 = vmatpush.msra.mxu0 %v430
  %510 = vmatpush.msra.mxu0 %v426
  %511 = vmatpush.msra.mxu0 %v422
  %512 = vmatpush.msra.mxu0 %v418
  %513 = vmatpush.msra.mxu0 %v414
  %514 = vmatmul.f32.gmra.mxu0 %v456
  %v515 = vpop.f32.mrf.mxu0
  %v516 = vadd.f32 %v452, %v515
  %517 = vdwg.mxu0
  %518 = vmatpush.msra.mxu0 0.0
  %519 = vmatpush.msra.mxu0 0.0
  %520 = vmatpush.msra.mxu0 0.0
  %521 = vmatpush.msra.mxu0 0.0
  %522 = vmatpush.msra.mxu0 0.0
  %523 = vmatpush.msra.mxu0 0.0
  %524 = vmatpush.msra.mxu0 0.0
  %525 = vmatpush.msra.mxu0 %v447
  %526 = vmatpush.msra.mxu0 %v443
  %527 = vmatpush.msra.mxu0 %v439
  %528 = vmatpush.msra.mxu0 %v435
  %529 = vmatpush.msra.mxu0 %v431
  %530 = vmatpush.msra.mxu0 %v427
  %531 = vmatpush.msra.mxu0 %v423
  %532 = vmatpush.msra.mxu0 %v419
  %533 = vmatpush.msra.mxu0 %v415
  %534 = vmatmul.f32.gmra.mxu0 %v456
  %v535 = vpop.f32.mrf.mxu0
  %v536 = vadd.f32 %v452, %v535
  %537 = vdwg.mxu0
  %vm538 = vcmask 1043456
  %v539 = vsel %vm538, %v476, 0.0
  %v540 = vsel %vm538, %v496, 0.0
  %v541 = vadd.f32 %v539, %v540
  %v542 = vsel %vm538, %v516, 0.0
  %v543 = vadd.f32 %v541, %v542
  %v544 = vsel %vm538, %v536, 0.0
  %v545 = vadd.f32 %v543, %v544
  %546 = vadd.xlane.f32.xlu0 %v545
  %v547 = vpop.xlane.xlu0 %546
  %v548 = vmul.f32 %v547, 0.001953125
  %v549 = vsub.f32 %v476, %v548
  %v550 = vsub.f32 %v496, %v548
  %v551 = vsub.f32 %v516, %v548
  %v552 = vsub.f32 %v536, %v548
  %v553 = vmul.f32 %v549, %v549
  %v554 = vmul.f32 %v550, %v550
  %v555 = vmul.f32 %v551, %v551
  %v556 = vmul.f32 %v552, %v552
  %v557 = vsel %vm538, %v553, 0.0
  %v558 = vsel %vm538, %v554, 0.0
  %v559 = vadd.f32 %v557, %v558
  %v560 = vsel %vm538, %v555, 0.0
  %v561 = vadd.f32 %v559, %v560
  %v562 = vsel %vm538, %v556, 0.0
  %v563 = vadd.f32 %v561, %v562
  %564 = vadd.xlane.f32.xlu0 %v563
  %v565 = vpop.xlane.xlu0 %564
  %v566 = vmul.f32 %v565, 0.001953125
  %v567 = vld [vmem:[%s6] sm:$0xf]
  %v568 = vadd.f32 %v566, 1e-05
  %v569 = vrsqrt.pop %v568
  %v570 = vmul.f32 %v569, %v568
  %v571 = vmul.f32 %v570, %v569
  %v572 = vmul.f32 0.5, %v571
  %v573 = vsub.f32 1.5, %v572
  %v574 = vmul.f32 %v569, %v573
  %vm575 = vweird.f32 %v568
  %vm576 = vweird.f32 %v569
  %vm577 = vmor %vm575, %vm576
  %v578 = vsel %vm577, %v569, %v574
  %v579 = vmul.f32 %v567, %v578
  %581 = vset.pattern.permute.xlu0 0
  %582 = vperm.xlu0 %581, %v579
  %v583 = vpop.permute.xlu0 %582
  %v585 = vmul.f32 %v549, %v583
  %v586 = vmul.f32 %v550, %v583
  %v587 = vmul.f32 %v551, %v583
  %v588 = vmul.f32 %v552, %v583
  %v589 = vld [vmem:[%s7] sm:$0xf]
  %591 = vset.pattern.permute.xlu0 0
  %592 = vperm.xlu0 %591, %v589
  %v593 = vpop.permute.xlu0 %592
  %v595 = vadd.f32 %v585, %v593
  %v596 = vadd.f32 %v586, %v593
  %v597 = vadd.f32 %v587, %v593
  %v598 = vadd.f32 %v588, %v593
  %v599 = vmax.f32 %v595, 0.0
  %v600 = vmax.f32 %v596, 0.0
  %v601 = vmax.f32 %v597, 0.0
  %v602 = vmax.f32 %v598, 0.0
  %603 = vrot.lane.b32.xlu0 %v599, 17
  %v604 = vpop.permute.xlu0 %603
  %605 = vrot.lane.b32.xlu0 %v600, 17
  %v606 = vpop.permute.xlu0 %605
  %607 = vrot.lane.b32.xlu0 %v601, 17
  %v608 = vpop.permute.xlu0 %607
  %609 = vrot.lane.b32.xlu0 %v602, 17
  %v610 = vpop.permute.xlu0 %609
  %v611 = vsel %vm145, %v608, %v610
  %v612 = vsel %vm145, %v606, %v608
  %v613 = vsel %vm145, %v604, %v606
  %v614 = vsel %vm145, %v610, %v604
  %v615 = vld [vmem:[%s3] ss:$8 sm:$0xf]
  %v617 = vperm.slane %v615, 0
  %v618 = vperm.slane %v615, 1
  %v619 = vperm.slane %v615, 2
  %v620 = vperm.slane %v615, 3
  %v625 = vmul.f32 %v614, %v617
  %v626 = vmul.f32 %v613, %v618
  %v627 = vmul.f32 %v612, %v619
  %v628 = vmul.f32 %v611, %v620
  %629 = vst [vmem:[#allocation3] sm:$0xf] %v625
  %630 = vst [vmem:[#allocation3 + $0x8] sm:$0xf] %v626
  %631 = vst [vmem:[#allocation3 + $0x10] sm:$0xf] %v627
  %632 = vst [vmem:[#allocation3 + $0x18] sm:$0xf] %v628
  %633 = vrot.lane.b32.xlu0 %v599, 16
  %v634 = vpop.permute.xlu0 %633
  %635 = vrot.lane.b32.xlu0 %v600, 16
  %v636 = vpop.permute.xlu0 %635
  %637 = vrot.lane.b32.xlu0 %v601, 16
  %v638 = vpop.permute.xlu0 %637
  %639 = vrot.lane.b32.xlu0 %v602, 16
  %v640 = vpop.permute.xlu0 %639
  %v641 = vsel %vm176, %v638, %v640
  %v642 = vsel %vm176, %v636, %v638
  %v643 = vsel %vm176, %v634, %v636
  %v644 = vsel %vm176, %v640, %v634
  %v645 = vld [vmem:[%s181] ss:$8 sm:$0xf]
  %v647 = vperm.slane %v645, 0
  %v648 = vperm.slane %v645, 1
  %v649 = vperm.slane %v645, 2
  %v650 = vperm.slane %v645, 3
  %v655 = vmul.f32 %v644, %v647
  %v656 = vmul.f32 %v643, %v648
  %v657 = vmul.f32 %v642, %v649
  %v658 = vmul.f32 %v641, %v650
  %v663 = vrot.slane %v655, 4
  %v664 = vrot.slane %v656, 4
  %v665 = vrot.slane %v657, 4
  %v666 = vrot.slane %v658, 4
  %671 = vst [vmem:[#allocation3] sm:$0xf0] %v663
  %672 = vst [vmem:[#allocation3 + $0x8] sm:$0xf0] %v664
  %673 = vst [vmem:[#allocation3 + $0x10] sm:$0xf0] %v665
  %674 = vst [vmem:[#allocation3 + $0x18] sm:$0xf0] %v666
  %675 = vrot.lane.b32.xlu0 %v599, 15
  %v676 = vpop.permute.xlu0 %675
  %677 = vrot.lane.b32.xlu0 %v600, 15
  %v678 = vpop.permute.xlu0 %677
  %679 = vrot.lane.b32.xlu0 %v601, 15
  %v680 = vpop.permute.xlu0 %679
  %681 = vrot.lane.b32.xlu0 %v602, 15
  %v682 = vpop.permute.xlu0 %681
  %v683 = vsel %vm208, %v680, %v682
  %v684 = vsel %vm208, %v678, %v680
  %v685 = vsel %vm208, %v676, %v678
  %v686 = vsel %vm208, %v682, %v676
  %v687 = vld [vmem:[%s213] ss:$8 sm:$0xf]
  %v689 = vperm.slane %v687, 0
  %v690 = vperm.slane %v687, 1
  %v691 = vperm.slane %v687, 2
  %v692 = vperm.slane %v687, 3
  %v697 = vmul.f32 %v686, %v689
  %v698 = vmul.f32 %v685, %v690
  %v699 = vmul.f32 %v684, %v691
  %v700 = vmul.f32 %v683, %v692
  %701 = vst [vmem:[#allocation3 + $0x20] sm:$0xf] %v697
  %702 = vst [vmem:[#allocation3 + $0x28] sm:$0xf] %v698
  %703 = vst [vmem:[#allocation3 + $0x30] sm:$0xf] %v699
  %704 = vst [vmem:[#allocation3 + $0x38] sm:$0xf] %v700
  %705 = vrot.lane.b32.xlu0 %v599, 1
  %v706 = vpop.permute.xlu0 %705
  %707 = vrot.lane.b32.xlu0 %v600, 1
  %v708 = vpop.permute.xlu0 %707
  %709 = vrot.lane.b32.xlu0 %v601, 1
  %v710 = vpop.permute.xlu0 %709
  %711 = vrot.lane.b32.xlu0 %v602, 1
  %v712 = vpop.permute.xlu0 %711
  %v713 = vsel %vm240, %v710, %v712
  %v714 = vsel %vm240, %v708, %v710
  %v715 = vsel %vm240, %v706, %v708
  %v716 = vsel %vm240, %v712, %v706
  %v717 = vld [vmem:[%s245] ss:$8 sm:$0xf]
  %v719 = vperm.slane %v717, 0
  %v720 = vperm.slane %v717, 1
  %v721 = vperm.slane %v717, 2
  %v722 = vperm.slane %v717, 3
  %v727 = vmul.f32 %v716, %v719
  %v728 = vmul.f32 %v715, %v720
  %v729 = vmul.f32 %v714, %v721
  %v730 = vmul.f32 %v713, %v722
  %v735 = vrot.slane %v727, 4
  %v736 = vrot.slane %v728, 4
  %v737 = vrot.slane %v729, 4
  %v738 = vrot.slane %v730, 4
  %743 = vst [vmem:[#allocation3 + $0x20] sm:$0xf0] %v735
  %744 = vst [vmem:[#allocation3 + $0x28] sm:$0xf0] %v736
  %745 = vst [vmem:[#allocation3 + $0x30] sm:$0xf0] %v737
  %746 = vst [vmem:[#allocation3 + $0x38] sm:$0xf0] %v738
  %v747 = vld [vmem:[%s264] ss:$8 sm:$0xf]
  %v749 = vperm.slane %v747, 0
  %v750 = vperm.slane %v747, 1
  %v751 = vperm.slane %v747, 2
  %v752 = vperm.slane %v747, 3
  %v757 = vmul.f32 %v599, %v749
  %v758 = vmul.f32 %v600, %v750
  %v759 = vmul.f32 %v601, %v751
  %v760 = vmul.f32 %v602, %v752
  %761 = vst [vmem:[#allocation3 + $0x40] sm:$0xf] %v757
  %762 = vst [vmem:[#allocation3 + $0x48] sm:$0xf] %v758
  %763 = vst [vmem:[#allocation3 + $0x50] sm:$0xf] %v759
  %764 = vst [vmem:[#allocation3 + $0x58] sm:$0xf] %v760
  %765 = vrot.lane.b32.xlu0 %v599, 127
  %v766 = vpop.permute.xlu0 %765
  %767 = vrot.lane.b32.xlu0 %v600, 127
  %v768 = vpop.permute.xlu0 %767
  %769 = vrot.lane.b32.xlu0 %v601, 127
  %v770 = vpop.permute.xlu0 %769
  %771 = vrot.lane.b32.xlu0 %v602, 127
  %v772 = vpop.permute.xlu0 %771
  %v773 = vsel %vm291, %v770, %v772
  %v774 = vsel %vm291, %v768, %v770
  %v775 = vsel %vm291, %v766, %v768
  %v776 = vsel %vm291, %v772, %v766
  %v777 = vld [vmem:[%s296] ss:$8 sm:$0xf]
  %v779 = vperm.slane %v777, 0
  %v780 = vperm.slane %v777, 1
  %v781 = vperm.slane %v777, 2
  %v782 = vperm.slane %v777, 3
  %v787 = vmul.f32 %v775, %v779
  %v788 = vmul.f32 %v774, %v780
  %v789 = vmul.f32 %v773, %v781
  %v790 = vmul.f32 %v776, %v782
  %v795 = vrot.slane %v787, 4
  %v796 = vrot.slane %v788, 4
  %v797 = vrot.slane %v789, 4
  %v798 = vrot.slane %v790, 4
  %803 = vst [vmem:[#allocation3 + $0x40] sm:$0xf0] %v795
  %804 = vst [vmem:[#allocation3 + $0x48] sm:$0xf0] %v796
  %805 = vst [vmem:[#allocation3 + $0x50] sm:$0xf0] %v797
  %806 = vst [vmem:[#allocation3 + $0x58] sm:$0xf0] %v798
  %807 = vrot.lane.b32.xlu0 %v599, 113
  %v808 = vpop.permute.xlu0 %807
  %809 = vrot.lane.b32.xlu0 %v600, 113
  %v810 = vpop.permute.xlu0 %809
  %811 = vrot.lane.b32.xlu0 %v601, 113
  %v812 = vpop.permute.xlu0 %811
  %813 = vrot.lane.b32.xlu0 %v602, 113
  %v814 = vpop.permute.xlu0 %813
  %v815 = vsel %vm323, %v812, %v814
  %v816 = vsel %vm323, %v810, %v812
  %v817 = vsel %vm323, %v808, %v810
  %v818 = vsel %vm323, %v814, %v808
  %v819 = vld [vmem:[%s328] ss:$8 sm:$0xf]
  %v821 = vperm.slane %v819, 0
  %v822 = vperm.slane %v819, 1
  %v823 = vperm.slane %v819, 2
  %v824 = vperm.slane %v819, 3
  %v829 = vmul.f32 %v817, %v821
  %v830 = vmul.f32 %v816, %v822
  %v831 = vmul.f32 %v815, %v823
  %v832 = vmul.f32 %v818, %v824
  %833 = vst [vmem:[#allocation3 + $0x60] sm:$0xf] %v829
  %834 = vst [vmem:[#allocation3 + $0x68] sm:$0xf] %v830
  %835 = vst [vmem:[#allocation3 + $0x70] sm:$0xf] %v831
  %836 = vst [vmem:[#allocation3 + $0x78] sm:$0xf] %v832
  %837 = vrot.lane.b32.xlu0 %v599, 112
  %v838 = vpop.permute.xlu0 %837
  %839 = vrot.lane.b32.xlu0 %v600, 112
  %v840 = vpop.permute.xlu0 %839
  %841 = vrot.lane.b32.xlu0 %v601, 112
  %v842 = vpop.permute.xlu0 %841
  %843 = vrot.lane.b32.xlu0 %v602, 112
  %v844 = vpop.permute.xlu0 %843
  %v845 = vsel %vm355, %v842, %v844
  %v846 = vsel %vm355, %v840, %v842
  %v847 = vsel %vm355, %v838, %v840
  %v848 = vsel %vm355, %v844, %v838
  %v849 = vld [vmem:[%s360] ss:$8 sm:$0xf]
  %v851 = vperm.slane %v849, 0
  %v852 = vperm.slane %v849, 1
  %v853 = vperm.slane %v849, 2
  %v854 = vperm.slane %v849, 3
  %v859 = vmul.f32 %v847, %v851
  %v860 = vmul.f32 %v846, %v852
  %v861 = vmul.f32 %v845, %v853
  %v862 = vmul.f32 %v848, %v854
  %v867 = vrot.slane %v859, 4
  %v868 = vrot.slane %v860, 4
  %v869 = vrot.slane %v861, 4
  %v870 = vrot.slane %v862, 4
  %875 = vst [vmem:[#allocation3 + $0x60] sm:$0xf0] %v867
  %876 = vst [vmem:[#allocation3 + $0x68] sm:$0xf0] %v868
  %877 = vst [vmem:[#allocation3 + $0x70] sm:$0xf0] %v869
  %878 = vst [vmem:[#allocation3 + $0x78] sm:$0xf0] %v870
  %879 = vrot.lane.b32.xlu0 %v599, 111
  %v880 = vpop.permute.xlu0 %879
  %881 = vrot.lane.b32.xlu0 %v600, 111
  %v882 = vpop.permute.xlu0 %881
  %883 = vrot.lane.b32.xlu0 %v601, 111
  %v884 = vpop.permute.xlu0 %883
  %885 = vrot.lane.b32.xlu0 %v602, 111
  %v886 = vpop.permute.xlu0 %885
  %v887 = vsel %vm387, %v884, %v886
  %v888 = vsel %vm387, %v882, %v884
  %v889 = vsel %vm387, %v880, %v882
  %v890 = vsel %vm387, %v886, %v880
  %v891 = vld [vmem:[%s392] ss:$8 sm:$0xf]
  %v893 = vperm.slane %v891, 0
  %v894 = vperm.slane %v891, 1
  %v895 = vperm.slane %v891, 2
  %v896 = vperm.slane %v891, 3
  %v901 = vmul.f32 %v889, %v893
  %v902 = vmul.f32 %v888, %v894
  %v903 = vmul.f32 %v887, %v895
  %v904 = vmul.f32 %v890, %v896
  %905 = vst [vmem:[#allocation3 + $0x80] sm:$0xf] %v901
  %906 = vst [vmem:[#allocation3 + $0x88] sm:$0xf] %v902
  %907 = vst [vmem:[#allocation3 + $0x90] sm:$0xf] %v903
  %908 = vst [vmem:[#allocation3 + $0x98] sm:$0xf] %v904
  %v909 = vld [vmem:[%s8] sm:$0xf]
  %v910 = vld [vmem:[#allocation3] sm:$0xff]
  %v911 = vld [vmem:[#allocation3 + $0x8] sm:$0xff]
  %v912 = vld [vmem:[#allocation3 + $0x10] sm:$0xff]
  %v913 = vld [vmem:[#allocation3 + $0x18] sm:$0xff]
  %v914 = vld [vmem:[#allocation3 + $0x20] sm:$0xff]
  %v915 = vld [vmem:[#allocation3 + $0x28] sm:$0xff]
  %v916 = vld [vmem:[#allocation3 + $0x30] sm:$0xff]
  %v917 = vld [vmem:[#allocation3 + $0x38] sm:$0xff]
  %v918 = vld [vmem:[#allocation3 + $0x40] sm:$0xff]
  %v919 = vld [vmem:[#allocation3 + $0x48] sm:$0xff]
  %v920 = vld [vmem:[#allocation3 + $0x50] sm:$0xff]
  %v921 = vld [vmem:[#allocation3 + $0x58] sm:$0xff]
  %v922 = vld [vmem:[#allocation3 + $0x60] sm:$0xff]
  %v923 = vld [vmem:[#allocation3 + $0x68] sm:$0xff]
  %v924 = vld [vmem:[#allocation3 + $0x70] sm:$0xff]
  %v925 = vld [vmem:[#allocation3 + $0x78] sm:$0xff]
  %v926 = vld [vmem:[#allocation3 + $0x80] sm:$0xf]
  %v927 = vld [vmem:[#allocation3 + $0x88] sm:$0xf]
  %v928 = vld [vmem:[#allocation3 + $0x90] sm:$0xf]
  %v929 = vld [vmem:[#allocation3 + $0x98] sm:$0xf]
  %v930 = vld [vmem:[%s9] sm:$0xf]
  %932 = vset.pattern.permute.xlu0 0
  %933 = vperm.xlu0 %932, %v930
  %v934 = vpop.permute.xlu0 %933
  %vm936 = vcmask 293888
  %v938 = vsel %vm936, %v909, 0
  %v941 = vsel %vm538, %v926, 0
  %v944 = vsel %vm538, %v927, 0
  %v947 = vsel %vm538, %v928, 0
  %v950 = vsel %vm538, %v929, 0
  %952 = vmatpush.msra.mxu0 0.0
  %953 = vmatpush.msra.mxu0 0.0
  %954 = vmatpush.msra.mxu0 0.0
  %955 = vmatpush.msra.mxu0 0.0
  %956 = vmatpush.msra.mxu0 0.0
  %957 = vmatpush.msra.mxu0 0.0
  %958 = vmatpush.msra.mxu0 0.0
  %959 = vmatpush.msra.mxu0 0.0
  %960 = vmatpush.msra.mxu0 0.0
  %961 = vmatpush.msra.mxu0 0.0
  %962 = vmatpush.msra.mxu0 0.0
  %963 = vmatpush.msra.mxu0 %v941
  %964 = vmatpush.msra.mxu0 %v922
  %965 = vmatpush.msra.mxu0 %v918
  %966 = vmatpush.msra.mxu0 %v914
  %967 = vmatpush.msra.mxu0 %v910
  %968 = vmatmul.f32.gmra.mxu0 %v938
  %v969 = vpop.f32.mrf.mxu0
  %v970 = vadd.f32 %v934, %v969
  %971 = vdwg.mxu0
  %972 = vmatpush.msra.mxu0 0.0
  %973 = vmatpush.msra.mxu0 0.0
  %974 = vmatpush.msra.mxu0 0.0
  %975 = vmatpush.msra.mxu0 0.0
  %976 = vmatpush.msra.mxu0 0.0
  %977 = vmatpush.msra.mxu0 0.0
  %978 = vmatpush.msra.mxu0 0.0
  %979 = vmatpush.msra.mxu0 0.0
  %980 = vmatpush.msra.mxu0 0.0
  %981 = vmatpush.msra.mxu0 0.0
  %982 = vmatpush.msra.mxu0 0.0
  %983 = vmatpush.msra.mxu0 %v944
  %984 = vmatpush.msra.mxu0 %v923
  %985 = vmatpush.msra.mxu0 %v919
  %986 = vmatpush.msra.mxu0 %v915
  %987 = vmatpush.msra.mxu0 %v911
  %988 = vmatmul.f32.gmra.mxu0 %v938
  %v989 = vpop.f32.mrf.mxu0
  %v990 = vadd.f32 %v934, %v989
  %991 = vdwg.mxu0
  %992 = vmatpush.msra.mxu0 0.0
  %993 = vmatpush.msra.mxu0 0.0
  %994 = vmatpush.msra.mxu0 0.0
  %995 = vmatpush.msra.mxu0 0.0
  %996 = vmatpush.msra.mxu0 0.0
  %997 = vmatpush.msra.mxu0 0.0
  %998 = vmatpush.msra.mxu0 0.0
  %999 = vmatpush.msra.mxu0 0.0
  %1000 = vmatpush.msra.mxu0 0.0
  %1001 = vmatpush.msra.mxu0 0.0
  %1002 = vmatpush.msra.mxu0 0.0
  %1003 = vmatpush.msra.mxu0 %v947
  %1004 = vmatpush.msra.mxu0 %v924
  %1005 = vmatpush.msra.mxu0 %v920
  %1006 = vmatpush.msra.mxu0 %v916
  %1007 = vmatpush.msra.mxu0 %v912
  %1008 = vmatmul.f32.gmra.mxu0 %v938
  %v1009 = vpop.f32.mrf.mxu0
  %v1010 = vadd.f32 %v934, %v1009
  %1011 = vdwg.mxu0
  %1012 = vmatpush.msra.mxu0 0.0
  %1013 = vmatpush.msra.mxu0 0.0
  %1014 = vmatpush.msra.mxu0 0.0
  %1015 = vmatpush.msra.mxu0 0.0
  %1016 = vmatpush.msra.mxu0 0.0
  %1017 = vmatpush.msra.mxu0 0.0
  %1018 = vmatpush.msra.mxu0 0.0
  %1019 = vmatpush.msra.mxu0 0.0
  %1020 = vmatpush.msra.mxu0 0.0
  %1021 = vmatpush.msra.mxu0 0.0
  %1022 = vmatpush.msra.mxu0 0.0
  %1023 = vmatpush.msra.mxu0 %v950
  %1024 = vmatpush.msra.mxu0 %v925
  %1025 = vmatpush.msra.mxu0 %v921
  %1026 = vmatpush.msra.mxu0 %v917
  %1027 = vmatpush.msra.mxu0 %v913
  %1028 = vmatmul.f32.gmra.mxu0 %v938
  %v1029 = vpop.f32.mrf.mxu0
  %v1030 = vadd.f32 %v934, %v1029
  %1031 = vdwg.mxu0
  %v1032 = vsel %vm538, %v970, 0.0
  %v1033 = vsel %vm538, %v990, 0.0
  %v1034 = vadd.f32 %v1032, %v1033
  %v1035 = vsel %vm538, %v1010, 0.0
  %v1036 = vadd.f32 %v1034, %v1035
  %v1037 = vsel %vm538, %v1030, 0.0
  %v1038 = vadd.f32 %v1036, %v1037
  %1039 = vadd.xlane.f32.xlu0 %v1038
  %v1040 = vpop.xlane.xlu0 %1039
  %v1041 = vmul.f32 %v1040, 0.001953125
  %v1042 = vsub.f32 %v970, %v1041
  %v1043 = vsub.f32 %v990, %v1041
  %v1044 = vsub.f32 %v1010, %v1041
  %v1045 = vsub.f32 %v1030, %v1041
  %v1046 = vmul.f32 %v1042, %v1042
  %v1047 = vmul.f32 %v1043, %v1043
  %v1048 = vmul.f32 %v1044, %v1044
  %v1049 = vmul.f32 %v1045, %v1045
  %v1050 = vsel %vm538, %v1046, 0.0
  %v1051 = vsel %vm538, %v1047, 0.0
  %v1052 = vadd.f32 %v1050, %v1051
  %v1053 = vsel %vm538, %v1048, 0.0
  %v1054 = vadd.f32 %v1052, %v1053
  %v1055 = vsel %vm538, %v1049, 0.0
  %v1056 = vadd.f32 %v1054, %v1055
  %1057 = vadd.xlane.f32.xlu0 %v1056
  %v1058 = vpop.xlane.xlu0 %1057
  %v1059 = vmul.f32 %v1058, 0.001953125
  %v1060 = vld [vmem:[%s10] sm:$0xf]
  %v1061 = vadd.f32 %v1059, 1e-05
  %v1062 = vrsqrt.pop %v1061
  %v1063 = vmul.f32 %v1062, %v1061
  %v1064 = vmul.f32 %v1063, %v1062
  %v1065 = vmul.f32 0.5, %v1064
  %v1066 = vsub.f32 1.5, %v1065
  %v1067 = vmul.f32 %v1062, %v1066
  %vm1068 = vweird.f32 %v1061
  %vm1069 = vweird.f32 %v1062
  %vm1070 = vmor %vm1068, %vm1069
  %v1071 = vsel %vm1070, %v1062, %v1067
  %v1072 = vmul.f32 %v1060, %v1071
  %1074 = vset.pattern.permute.xlu0 0
  %1075 = vperm.xlu0 %1074, %v1072
  %v1076 = vpop.permute.xlu0 %1075
  %v1078 = vmul.f32 %v1042, %v1076
  %v1079 = vmul.f32 %v1043, %v1076
  %v1080 = vmul.f32 %v1044, %v1076
  %v1081 = vmul.f32 %v1045, %v1076
  %v1082 = vld [vmem:[%s11] sm:$0xf]
  %1084 = vset.pattern.permute.xlu0 0
  %1085 = vperm.xlu0 %1084, %v1082
  %v1086 = vpop.permute.xlu0 %1085
  %v1088 = vadd.f32 %v1078, %v1086
  %v1089 = vadd.f32 %v1079, %v1086
  %v1090 = vadd.f32 %v1080, %v1086
  %v1091 = vadd.f32 %v1081, %v1086
  %v1092 = vmax.f32 %v1088, 0.0
  %v1093 = vmax.f32 %v1089, 0.0
  %v1094 = vmax.f32 %v1090, 0.0
  %v1095 = vmax.f32 %v1091, 0.0
  %v1098 = vrot.slane %v1093, 4
  %v1099 = vsel %vm538, %v1092, %v1098
  %1101 = vst [vmem:[%s12] sm:$0xff] %v1099
  %v1104 = vrot.slane %v1095, 4
  %v1105 = vsel %vm538, %v1094, %v1104
  %s1107 = scalar_lea.vmem %s12, 8
  %1108 = vst [vmem:[%s1107] sm:$0xff] %v1105
  // Predicated region
  $region50: #{up_forward.1} parent=0 // pred_check
    _
  $region51: #{up_forward.1} parent=0 // pred_check_branch
    %1110 = sbr.rel (0) target = $region53
  $region52: #{up_forward.1} parent=0 // pred_region
    _
  $region53: #{up_forward.1} parent=0 // pred_fallthru
    _
  // Predicated region
  $region54: #{up_forward.1} parent=0 // pred_check
    _
  $region55: #{up_forward.1} parent=0 // pred_check_branch
    %1112 = sbr.rel (0) target = $region57
  $region56: #{up_forward.1} parent=0 // pred_region
    _
  $region57: #{up_forward.1} parent=0 // pred_fallthru
    _

</llo_original>
